<compile_context>
chip_gen: v5e
topology: v5e:2x2
jax: 0.10.0
libtpu: 0.0.40
codegen_flags: <defaults>
</compile_context>

<pallas_src>
import functools

import jax
import jax.numpy as jnp
import numpy as np
from jax import lax
from jax.experimental import pallas as pl
from jax.experimental.pallas import tpu as pltpu


# ----------------------------------------------------------------------------
# In-kernel helpers.
# ----------------------------------------------------------------------------
def _attention_layer(h, a_src_rows, a_dst_rows, adj, gumbel, ow_t, inv_tau):
    """One GSAT attention layer for a single graph (head-major internally).

    h          : (N, H*D)    per-head node features, flat
    a_src_rows : (H, H*D)    block-diagonal rows built from a_src (H, D)
    a_dst_rows : (H, H*D)    block-diagonal rows built from a_dst (H, D)
    adj        : (N, N)      adjacency (multiplicative mask, as in the spec)
    gumbel     : (H, N, N)   head-major Gumbel noise
    ow_t       : (H*D, F)    output projection, transposed
    returns    : (N, F)      leaky_relu(output projection)
    """
    # (1) per-head src/dst attention scalars, directly head-major: (H, N).
    h_src = lax.dot_general(a_src_rows, h, (((1,), (1,)), ((), ())),
                            preferred_element_type=jnp.float32)          # (H, N)
    h_dst = lax.dot_general(a_dst_rows, h, (((1,), (1,)), ((), ())),
                            preferred_element_type=jnp.float32)          # (H, N)

    # (2) head-major scores; softmax axis (n) is the minor/lane axis.
    scores = (h_src[:, :, None] + h_dst[:, None, :]) * adj[None, :, :]   # (H, M, N)
    logits = (scores + gumbel) * inv_tau
    logits = logits - jnp.max(logits, axis=-1, keepdims=True)
    e = jnp.exp(logits)
    attn = e / jnp.sum(e, axis=-1, keepdims=True)                        # (H, M, N)

    # (3) torch's 'bmnk,bmhd->bnhd' sums attention over its own head axis k,
    #     so reduce heads first (VPU adds), then one MXU contraction over m.
    attn_sum = jnp.sum(attn, axis=0)                                     # (M, N)
    hp = lax.dot_general(attn_sum, h, (((0,), (0,)), ((), ())),
                         preferred_element_type=jnp.float32)             # (N, H*D)

    # (4) output projection: single 2-D matmul (contraction width H*D), then
    #     leaky_relu(0.01).
    y = jnp.dot(hp, ow_t, preferred_element_type=jnp.float32)            # (N, F)
    return jnp.where(y > 0.0, y, 0.01 * y)


def _gsat_fused_kernel(x_ref, adj_ref, g1_ref, g2_ref,
                       w1_ref, asrc1_ref, adst1_ref, ow1_ref,
                       w2_ref, asrc2_ref, adst2_ref, ow2_ref,
                       out_ref, *, tau):
    inv_tau = 1.0 / tau
    bt, n_nodes, f_in = x_ref.shape

    adj = adj_ref[...]
    w1 = w1_ref[...]
    asrc1 = asrc1_ref[...]
    adst1 = adst1_ref[...]
    ow1 = ow1_ref[...]
    w2 = w2_ref[...]
    asrc2 = asrc2_ref[...]
    adst2 = adst2_ref[...]
    ow2 = ow2_ref[...]

    # Layer-1 feature projection fused across the whole batch tile (fills
    # sublanes / MXU rows when bt > 1).
    h1_all = jnp.dot(x_ref[...].reshape(bt * n_nodes, f_in), w1,
                     preferred_element_type=jnp.float32)                 # (bt*N, H*D1)

    for b in range(bt):  # static unroll over the graphs in this tile
        h1 = h1_all[b * n_nodes:(b + 1) * n_nodes]
        y1 = _attention_layer(h1, asrc1, adst1, adj, g1_ref[b], ow1, inv_tau)

        h2 = jnp.dot(y1, w2, preferred_element_type=jnp.float32)         # (N, H*D2)
        y2 = _attention_layer(h2, asrc2, adst2, adj, g2_ref[b], ow2, inv_tau)

        out_ref[b] = y2.astype(out_ref.dtype)


# ----------------------------------------------------------------------------
# Wrapper: host-side weight re-layout + the single fused pallas_call.
# ----------------------------------------------------------------------------
def _head_block_rows(a):
    """(H, D) -> (H, H*D) where row k holds a[k] in columns [k*D, (k+1)*D)."""
    H, D = a.shape
    eye = jnp.eye(H, dtype=a.dtype)
    return (eye[:, :, None] * a[:, None, :]).reshape(H, H * D)


def _pick_batch_tile(batch):
    # Merge graphs per grid step to amortize the ~0.35us/step pipeline overhead,
    # but keep >= 2 grid steps so the "parallel" batch axis can still be sharded
    # across the two v7x TensorCores.
    target = max(1, batch // 2)
    for bt in range(target, 0, -1):
        if batch % bt == 0:
            return bt
    return 1


def gsat_forward(params, x, adj, gumbel1, gumbel2, *, hidden_features,
                 out_features, num_heads, tau, batch_tile=None):
    B, N, F_in = x.shape
    H, D1, D2 = num_heads, hidden_features, out_features
    if batch_tile is None:
        batch_tile = _pick_batch_tile(B)
    assert B % batch_tile == 0
    grid_b = B // batch_tile

    # Host-side weight plumbing (tiny, done in plain JAX once).
    w1_t = params["W1"].T                      # (F_in, H*D1)
    w2_t = params["W2"].T                      # (D1,  H*D2)
    asrc1 = _head_block_rows(params["a_src1"])  # (H, H*D1)
    adst1 = _head_block_rows(params["a_dst1"])  # (H, H*D1)
    asrc2 = _head_block_rows(params["a_src2"])  # (H, H*D2)
    adst2 = _head_block_rows(params["a_dst2"])  # (H, H*D2)
    ow1_t = params["out1"].T                   # (H*D1, D1)
    ow2_t = params["out2"].T                   # (H*D2, D2)

    kernel = functools.partial(_gsat_fused_kernel, tau=tau)

    grid_spec = pltpu.PrefetchScalarGridSpec(
        num_scalar_prefetch=0,
        grid=(grid_b,),
        in_specs=[
            pl.BlockSpec((batch_tile, N, F_in), lambda i: (i, 0, 0)),      # x
            pl.BlockSpec((N, N), lambda i: (0, 0)),                        # adj
            pl.BlockSpec((batch_tile, H, N, N), lambda i: (i, 0, 0, 0)),   # gumbel L1
            pl.BlockSpec((batch_tile, H, N, N), lambda i: (i, 0, 0, 0)),   # gumbel L2
            pl.BlockSpec((F_in, H * D1), lambda i: (0, 0)),                # W1^T
            pl.BlockSpec((H, H * D1), lambda i: (0, 0)),                   # a_src1 rows
            pl.BlockSpec((H, H * D1), lambda i: (0, 0)),                   # a_dst1 rows
            pl.BlockSpec((H * D1, D1), lambda i: (0, 0)),                  # out1^T
            pl.BlockSpec((D1, H * D2), lambda i: (0, 0)),                  # W2^T
            pl.BlockSpec((H, H * D2), lambda i: (0, 0)),                   # a_src2 rows
            pl.BlockSpec((H, H * D2), lambda i: (0, 0)),                   # a_dst2 rows
            pl.BlockSpec((H * D2, D2), lambda i: (0, 0)),                  # out2^T
        ],
        out_specs=pl.BlockSpec((batch_tile, N, D2), lambda i: (i, 0, 0)),
    )

    return pl.pallas_call(
        kernel,
        grid_spec=grid_spec,
        out_shape=jax.ShapeDtypeStruct((B, N, D2), jnp.float32),
        compiler_params=pltpu.CompilerParams(
            dimension_semantics=("parallel",)),          # batch axis -> megacore
    )(x, adj, gumbel1, gumbel2,
      w1_t, asrc1, adst1, ow1_t,
      w2_t, asrc2, adst2, ow2_t)


# ----------------------------------------------------------------------------
# Parameter init (matches torch xavier_uniform) + pure-JAX reference that
# mirrors the PyTorch module line-by-line (including the literal einsum).
# ----------------------------------------------------------------------------
def _xavier_uniform(key, shape):
    fan_out, fan_in = shape[0], shape[1]
    bound = np.sqrt(6.0 / (fan_in + fan_out))
    return jax.random.uniform(key, shape, jnp.float32, -bound, bound)


def init_gsat_params(key, in_features, hidden_features, out_features, num_heads):
    ks = jax.random.split(key, 8)
    return dict(
        W1=_xavier_uniform(ks[0], (num_heads * hidden_features, in_features)),
        a_src1=_xavier_uniform(ks[1], (num_heads, hidden_features)),
        a_dst1=_xavier_uniform(ks[2], (num_heads, hidden_features)),
        W2=_xavier_uniform(ks[3], (num_heads * out_features, hidden_features)),
        a_src2=_xavier_uniform(ks[4], (num_heads, out_features)),
        a_dst2=_xavier_uniform(ks[5], (num_heads, out_features)),
        out1=_xavier_uniform(ks[6], (hidden_features, num_heads * hidden_features)),
        out2=_xavier_uniform(ks[7], (out_features, num_heads * out_features)),
    )


def _ref_layer(x, W, a_src, a_dst, adj, gumbel_bmnk, outW, num_heads, head_dim, tau):
    B, N, _ = x.shape
    H, D = num_heads, head_dim
    h = x @ W.T                                              # (B, N, H*D)
    h4 = h.reshape(B, N, H, D)
    h_src = (h4 * a_src[None, None]).sum(-1)                 # (B, N, H)
    h_dst = (h4 * a_dst[None, None]).sum(-1)                 # (B, N, H)
    scores = h_src[:, :, None, :] + h_dst[:, None, :, :]     # (B, M, N, H)
    scores = scores * adj[None, :, :, None]
    attn = jax.nn.softmax((scores + gumbel_bmnk) / tau, axis=-2)   # torch dim=-2
    # Literal torch einsum 'bmnk,bmhd->bnhd' (attention summed over its head axis k).
    h_prime = jnp.einsum('bmnk,bmhd->bnhd', attn, h4).reshape(B, N, H * D)
    y = h_prime @ outW.T
    return jnp.where(y > 0, y, 0.01 * y)


def gsat_forward_ref(params, x, adj, gumbel1_bhmn, gumbel2_bhmn, *,
                     hidden_features, out_features, num_heads, tau):
    g1 = jnp.transpose(gumbel1_bhmn, (0, 2, 3, 1))   # (B,H,M,N) -> (B,M,N,H)
    g2 = jnp.transpose(gumbel2_bhmn, (0, 2, 3, 1))
    h1 = _ref_layer(x, params["W1"], params["a_src1"], params["a_dst1"], adj,
                    g1, params["out1"], num_heads, hidden_features, tau)
    h2 = _ref_layer(h1, params["W2"], params["a_src2"], params["a_dst2"], adj,
                    g2, params["out2"], num_heads, out_features, tau)
    return h2


# ----------------------------------------------------------------------------
if __name__ == "__main__":
    B, N = 2, 16
    in_features, hidden_features, out_features, num_heads = 32, 16, 8, 4
    tau = 1.0

    root = jax.random.PRNGKey(0)
    k_param, k_x, k_adj, k_g1, k_g2 = jax.random.split(root, 5)

    params = init_gsat_params(k_param, in_features, hidden_features,
                              out_features, num_heads)
    x = jax.random.normal(k_x, (B, N, in_features), jnp.float32)
    adj = (jax.random.uniform(k_adj, (N, N)) > 0.5).astype(jnp.float32)
    # Host-generated Gumbel(0,1) noise, head-major (B, H, M, N); the reference
    # uses the identical noise so the comparison is exact up to fp reassociation.
    g1 = jax.random.gumbel(k_g1, (B, num_heads, N, N), jnp.float32)
    g2 = jax.random.gumbel(k_g2, (B, num_heads, N, N), jnp.float32)

    out = gsat_forward(params, x, adj, g1, g2,
                       hidden_features=hidden_features,
                       out_features=out_features,
                       num_heads=num_heads, tau=tau)
    out = jax.block_until_ready(out)
    assert out.shape == (B, N, out_features), out.shape

    ref = gsat_forward_ref(params, x, adj, g1, g2,
                           hidden_features=hidden_features,
                           out_features=out_features,
                           num_heads=num_heads, tau=tau)
    ref = jax.block_until_ready(ref)

    np.testing.assert_allclose(np.asarray(out), np.asarray(ref),
                               rtol=2e-4, atol=2e-4)
    print("KERNEL_OK")
</pallas_src>

<mosaic_0001>
module attributes {stable_mosaic.version = 11 : i64} {
  func.func @_gsat_fused_kernel(%arg0: i32, %arg1: memref<1x16x32xf32, #tpu.memory_space<vmem>>, %arg2: memref<16x16xf32, #tpu.memory_space<vmem>>, %arg3: memref<1x4x16x16xf32, #tpu.memory_space<vmem>>, %arg4: memref<1x4x16x16xf32, #tpu.memory_space<vmem>>, %arg5: memref<32x64xf32, #tpu.memory_space<vmem>>, %arg6: memref<4x64xf32, #tpu.memory_space<vmem>>, %arg7: memref<4x64xf32, #tpu.memory_space<vmem>>, %arg8: memref<64x16xf32, #tpu.memory_space<vmem>>, %arg9: memref<16x32xf32, #tpu.memory_space<vmem>>, %arg10: memref<4x32xf32, #tpu.memory_space<vmem>>, %arg11: memref<4x32xf32, #tpu.memory_space<vmem>>, %arg12: memref<32x8xf32, #tpu.memory_space<vmem>>, %arg13: memref<1x16x8xf32, #tpu.memory_space<vmem>>) attributes {dimension_semantics = [#tpu.dimension_semantics<parallel>], iteration_bounds = array<i64: 2>, scalar_prefetch = 0 : i64, scratch_operands = 0 : i64, tpu.core_type = #tpu.core_type<tc>, window_params = [{transform_indices = @transform_0, window_bounds = array<i64: 1, 16, 32>}, {pipeline_mode = #tpu.pipeline_mode<synchronous>, transform_indices = @transform_1, window_bounds = array<i64: 16, 16>}, {transform_indices = @transform_2, window_bounds = array<i64: 1, 4, 16, 16>}, {transform_indices = @transform_3, window_bounds = array<i64: 1, 4, 16, 16>}, {pipeline_mode = #tpu.pipeline_mode<synchronous>, transform_indices = @transform_4, window_bounds = array<i64: 32, 64>}, {pipeline_mode = #tpu.pipeline_mode<synchronous>, transform_indices = @transform_5, window_bounds = array<i64: 4, 64>}, {pipeline_mode = #tpu.pipeline_mode<synchronous>, transform_indices = @transform_6, window_bounds = array<i64: 4, 64>}, {pipeline_mode = #tpu.pipeline_mode<synchronous>, transform_indices = @transform_7, window_bounds = array<i64: 64, 16>}, {pipeline_mode = #tpu.pipeline_mode<synchronous>, transform_indices = @transform_8, window_bounds = array<i64: 16, 32>}, {pipeline_mode = #tpu.pipeline_mode<synchronous>, transform_indices = @transform_9, window_bounds = array<i64: 4, 32>}, {pipeline_mode = #tpu.pipeline_mode<synchronous>, transform_indices = @transform_10, window_bounds = array<i64: 4, 32>}, {pipeline_mode = #tpu.pipeline_mode<synchronous>, transform_indices = @transform_11, window_bounds = array<i64: 32, 8>}, {transform_indices = @transform_12, window_bounds = array<i64: 1, 16, 8>}]} {
    %c0 = arith.constant 0 : index
    %c0_0 = arith.constant 0 : index
    %0 = vector.load %arg2[%c0, %c0_0] : memref<16x16xf32, #tpu.memory_space<vmem>>, vector<16x16xf32>
    %c0_1 = arith.constant 0 : index
    %c0_2 = arith.constant 0 : index
    %1 = vector.load %arg5[%c0_1, %c0_2] : memref<32x64xf32, #tpu.memory_space<vmem>>, vector<32x64xf32>
    %c0_3 = arith.constant 0 : index
    %c0_4 = arith.constant 0 : index
    %2 = vector.load %arg6[%c0_3, %c0_4] : memref<4x64xf32, #tpu.memory_space<vmem>>, vector<4x64xf32>
    %c0_5 = arith.constant 0 : index
    %c0_6 = arith.constant 0 : index
    %3 = vector.load %arg7[%c0_5, %c0_6] : memref<4x64xf32, #tpu.memory_space<vmem>>, vector<4x64xf32>
    %c0_7 = arith.constant 0 : index
    %c0_8 = arith.constant 0 : index
    %4 = vector.load %arg8[%c0_7, %c0_8] : memref<64x16xf32, #tpu.memory_space<vmem>>, vector<64x16xf32>
    %c0_9 = arith.constant 0 : index
    %c0_10 = arith.constant 0 : index
    %5 = vector.load %arg9[%c0_9, %c0_10] : memref<16x32xf32, #tpu.memory_space<vmem>>, vector<16x32xf32>
    %c0_11 = arith.constant 0 : index
    %c0_12 = arith.constant 0 : index
    %6 = vector.load %arg10[%c0_11, %c0_12] : memref<4x32xf32, #tpu.memory_space<vmem>>, vector<4x32xf32>
    %c0_13 = arith.constant 0 : index
    %c0_14 = arith.constant 0 : index
    %7 = vector.load %arg11[%c0_13, %c0_14] : memref<4x32xf32, #tpu.memory_space<vmem>>, vector<4x32xf32>
    %c0_15 = arith.constant 0 : index
    %c0_16 = arith.constant 0 : index
    %8 = vector.load %arg12[%c0_15, %c0_16] : memref<32x8xf32, #tpu.memory_space<vmem>>, vector<32x8xf32>
    %c0_17 = arith.constant 0 : index
    %c0_18 = arith.constant 0 : index
    %c0_19 = arith.constant 0 : index
    %9 = vector.load %arg1[%c0_17, %c0_18, %c0_19] : memref<1x16x32xf32, #tpu.memory_space<vmem>>, vector<1x16x32xf32>
    %10 = vector.shape_cast %9 : vector<1x16x32xf32> to vector<16x32xf32>
    %cst = arith.constant dense<0.000000e+00> : vector<16x64xf32>
    %11 = tpu.matmul %10, %1, %cst {dimension_numbers = #tpu.dot_dimension_numbers<[1], [0], [0], [1], [0, 0, 1, 1], [], []>} : vector<16x32xf32>, vector<32x64xf32>, vector<16x64xf32> -> vector<16x64xf32>
    %c0_20 = arith.constant 0 : index
    %c0_21 = arith.constant 0 : index
    %c0_22 = arith.constant 0 : index
    %c0_23 = arith.constant 0 : index
    %12 = vector.load %arg3[%c0_20, %c0_21, %c0_22, %c0_23] : memref<1x4x16x16xf32, #tpu.memory_space<vmem>>, vector<1x4x16x16xf32>
    %13 = vector.shape_cast %12 : vector<1x4x16x16xf32> to vector<4x16x16xf32>
    %cst_24 = arith.constant dense<0.000000e+00> : vector<4x16xf32>
    %14 = tpu.matmul %2, %11, %cst_24 {dimension_numbers = #tpu.dot_dimension_numbers<[1], [1], [0], [0], [0, 0, 1, 0], [], []>} : vector<4x64xf32>, vector<16x64xf32>, vector<4x16xf32> -> vector<4x16xf32>
    %cst_25 = arith.constant dense<0.000000e+00> : vector<4x16xf32>
    %15 = tpu.matmul %3, %11, %cst_25 {dimension_numbers = #tpu.dot_dimension_numbers<[1], [1], [0], [0], [0, 0, 1, 0], [], []>} : vector<4x64xf32>, vector<16x64xf32>, vector<4x16xf32> -> vector<4x16xf32>
    %16 = vector.shape_cast %14 : vector<4x16xf32> to vector<4x16x1xf32>
    %17 = vector.shape_cast %15 : vector<4x16xf32> to vector<4x1x16xf32>
    %18 = vector.broadcast %16 : vector<4x16x1xf32> to vector<4x16x16xf32>
    %19 = vector.broadcast %17 : vector<4x1x16xf32> to vector<4x16x16xf32>
    %20 = arith.addf %18, %19 : vector<4x16x16xf32>
    %21 = vector.shape_cast %0 : vector<16x16xf32> to vector<1x16x16xf32>
    %22 = vector.broadcast %21 : vector<1x16x16xf32> to vector<4x16x16xf32>
    %23 = arith.mulf %20, %22 : vector<4x16x16xf32>
    %24 = arith.addf %23, %13 : vector<4x16x16xf32>
    %cst_26 = arith.constant 1.000000e+00 : f32
    %25 = vector.broadcast %cst_26 : f32 to vector<4x16x16xf32>
    %26 = arith.mulf %24, %25 : vector<4x16x16xf32>
    %cst_27 = arith.constant dense<0xFF800000> : vector<4x16xf32>
    %27 = vector.multi_reduction <maximumf>, %26, %cst_27 [2] : vector<4x16x16xf32> to vector<4x16xf32>
    %28 = vector.shape_cast %27 : vector<4x16xf32> to vector<4x16x1xf32>
    %29 = vector.broadcast %28 : vector<4x16x1xf32> to vector<4x16x16xf32>
    %30 = arith.subf %26, %29 : vector<4x16x16xf32>
    %31 = math.exp %30 : vector<4x16x16xf32>
    %cst_28 = arith.constant dense<0.000000e+00> : vector<4x16xf32>
    %32 = vector.multi_reduction <add>, %31, %cst_28 [2] : vector<4x16x16xf32> to vector<4x16xf32>
    %33 = vector.shape_cast %32 : vector<4x16xf32> to vector<4x16x1xf32>
    %34 = vector.broadcast %33 : vector<4x16x1xf32> to vector<4x16x16xf32>
    %35 = arith.divf %31, %34 : vector<4x16x16xf32>
    %cst_29 = arith.constant dense<0.000000e+00> : vector<16x16xf32>
    %36 = vector.multi_reduction <add>, %35, %cst_29 [0] : vector<4x16x16xf32> to vector<16x16xf32>
    %cst_30 = arith.constant dense<0.000000e+00> : vector<16x64xf32>
    %37 = tpu.matmul %36, %11, %cst_30 {dimension_numbers = #tpu.dot_dimension_numbers<[0], [0], [1], [1], [0, 1, 1, 1], [], []>} : vector<16x16xf32>, vector<16x64xf32>, vector<16x64xf32> -> vector<16x64xf32>
    %cst_31 = arith.constant dense<0.000000e+00> : vector<16x16xf32>
    %38 = tpu.matmul %37, %4, %cst_31 {dimension_numbers = #tpu.dot_dimension_numbers<[1], [0], [0], [1], [0, 0, 1, 1], [], []>} : vector<16x64xf32>, vector<64x16xf32>, vector<16x16xf32> -> vector<16x16xf32>
    %cst_32 = arith.constant 0.000000e+00 : f32
    %39 = vector.broadcast %cst_32 : f32 to vector<16x16xf32>
    %40 = arith.cmpf ogt, %38, %39 : vector<16x16xf32>
    %cst_33 = arith.constant 0.00999999977 : f32
    %41 = vector.broadcast %cst_33 : f32 to vector<16x16xf32>
    %42 = arith.mulf %41, %38 : vector<16x16xf32>
    %43 = arith.select %40, %38, %42 : vector<16x16xi1>, vector<16x16xf32>
    %cst_34 = arith.constant dense<0.000000e+00> : vector<16x32xf32>
    %44 = tpu.matmul %43, %5, %cst_34 {dimension_numbers = #tpu.dot_dimension_numbers<[1], [0], [0], [1], [0, 0, 1, 1], [], []>} : vector<16x16xf32>, vector<16x32xf32>, vector<16x32xf32> -> vector<16x32xf32>
    %c0_35 = arith.constant 0 : index
    %c0_36 = arith.constant 0 : index
    %c0_37 = arith.constant 0 : index
    %c0_38 = arith.constant 0 : index
    %45 = vector.load %arg4[%c0_35, %c0_36, %c0_37, %c0_38] : memref<1x4x16x16xf32, #tpu.memory_space<vmem>>, vector<1x4x16x16xf32>
    %46 = vector.shape_cast %45 : vector<1x4x16x16xf32> to vector<4x16x16xf32>
    %cst_39 = arith.constant dense<0.000000e+00> : vector<4x16xf32>
    %47 = tpu.matmul %6, %44, %cst_39 {dimension_numbers = #tpu.dot_dimension_numbers<[1], [1], [0], [0], [0, 0, 1, 0], [], []>} : vector<4x32xf32>, vector<16x32xf32>, vector<4x16xf32> -> vector<4x16xf32>
    %cst_40 = arith.constant dense<0.000000e+00> : vector<4x16xf32>
    %48 = tpu.matmul %7, %44, %cst_40 {dimension_numbers = #tpu.dot_dimension_numbers<[1], [1], [0], [0], [0, 0, 1, 0], [], []>} : vector<4x32xf32>, vector<16x32xf32>, vector<4x16xf32> -> vector<4x16xf32>
    %49 = vector.shape_cast %47 : vector<4x16xf32> to vector<4x16x1xf32>
    %50 = vector.shape_cast %48 : vector<4x16xf32> to vector<4x1x16xf32>
    %51 = vector.broadcast %49 : vector<4x16x1xf32> to vector<4x16x16xf32>
    %52 = vector.broadcast %50 : vector<4x1x16xf32> to vector<4x16x16xf32>
    %53 = arith.addf %51, %52 : vector<4x16x16xf32>
    %54 = vector.shape_cast %0 : vector<16x16xf32> to vector<1x16x16xf32>
    %55 = vector.broadcast %54 : vector<1x16x16xf32> to vector<4x16x16xf32>
    %56 = arith.mulf %53, %55 : vector<4x16x16xf32>
    %57 = arith.addf %56, %46 : vector<4x16x16xf32>
    %cst_41 = arith.constant 1.000000e+00 : f32
    %58 = vector.broadcast %cst_41 : f32 to vector<4x16x16xf32>
    %59 = arith.mulf %57, %58 : vector<4x16x16xf32>
    %cst_42 = arith.constant dense<0xFF800000> : vector<4x16xf32>
    %60 = vector.multi_reduction <maximumf>, %59, %cst_42 [2] : vector<4x16x16xf32> to vector<4x16xf32>
    %61 = vector.shape_cast %60 : vector<4x16xf32> to vector<4x16x1xf32>
    %62 = vector.broadcast %61 : vector<4x16x1xf32> to vector<4x16x16xf32>
    %63 = arith.subf %59, %62 : vector<4x16x16xf32>
    %64 = math.exp %63 : vector<4x16x16xf32>
    %cst_43 = arith.constant dense<0.000000e+00> : vector<4x16xf32>
    %65 = vector.multi_reduction <add>, %64, %cst_43 [2] : vector<4x16x16xf32> to vector<4x16xf32>
    %66 = vector.shape_cast %65 : vector<4x16xf32> to vector<4x16x1xf32>
    %67 = vector.broadcast %66 : vector<4x16x1xf32> to vector<4x16x16xf32>
    %68 = arith.divf %64, %67 : vector<4x16x16xf32>
    %cst_44 = arith.constant dense<0.000000e+00> : vector<16x16xf32>
    %69 = vector.multi_reduction <add>, %68, %cst_44 [0] : vector<4x16x16xf32> to vector<16x16xf32>
    %cst_45 = arith.constant dense<0.000000e+00> : vector<16x32xf32>
    %70 = tpu.matmul %69, %44, %cst_45 {dimension_numbers = #tpu.dot_dimension_numbers<[0], [0], [1], [1], [0, 1, 1, 1], [], []>} : vector<16x16xf32>, vector<16x32xf32>, vector<16x32xf32> -> vector<16x32xf32>
    %cst_46 = arith.constant dense<0.000000e+00> : vector<16x8xf32>
    %71 = tpu.matmul %70, %8, %cst_46 {dimension_numbers = #tpu.dot_dimension_numbers<[1], [0], [0], [1], [0, 0, 1, 1], [], []>} : vector<16x32xf32>, vector<32x8xf32>, vector<16x8xf32> -> vector<16x8xf32>
    %cst_47 = arith.constant 0.000000e+00 : f32
    %72 = vector.broadcast %cst_47 : f32 to vector<16x8xf32>
    %73 = arith.cmpf ogt, %71, %72 : vector<16x8xf32>
    %cst_48 = arith.constant 0.00999999977 : f32
    %74 = vector.broadcast %cst_48 : f32 to vector<16x8xf32>
    %75 = arith.mulf %74, %71 : vector<16x8xf32>
    %76 = arith.select %73, %71, %75 : vector<16x8xi1>, vector<16x8xf32>
    %c0_49 = arith.constant 0 : index
    %c0_50 = arith.constant 0 : index
    %c0_51 = arith.constant 0 : index
    %77 = vector.load %arg13[%c0_49, %c0_50, %c0_51] : memref<1x16x8xf32, #tpu.memory_space<vmem>>, vector<1x16x8xf32>
    %78 = vector.shape_cast %77 : vector<1x16x8xf32> to vector<16x8xf32>
    %79 = vector.shape_cast %76 : vector<16x8xf32> to vector<1x16x8xf32>
    tpu.vector_store %arg13[%c0_49, %c0_50, %c0_51], %79 {strides = array<i32>} : memref<1x16x8xf32, #tpu.memory_space<vmem>>, vector<1x16x8xf32>,
    return
  }
  func.func @transform_0(%arg0: i32) -> (i32, i32, i32) {
    %c0_i32 = arith.constant 0 : i32
    %c0_i32_0 = arith.constant 0 : i32
    %c0_i32_1 = arith.constant 0 : i32
    return %arg0, %c0_i32, %c0_i32_0 : i32, i32, i32
  }
  func.func @transform_1(%arg0: i32) -> (i32, i32) {
    %c0_i32 = arith.constant 0 : i32
    %c0_i32_0 = arith.constant 0 : i32
    %c0_i32_1 = arith.constant 0 : i32
    return %c0_i32, %c0_i32_0 : i32, i32
  }
  func.func @transform_2(%arg0: i32) -> (i32, i32, i32, i32) {
    %c0_i32 = arith.constant 0 : i32
    %c0_i32_0 = arith.constant 0 : i32
    %c0_i32_1 = arith.constant 0 : i32
    %c0_i32_2 = arith.constant 0 : i32
    return %arg0, %c0_i32, %c0_i32_0, %c0_i32_1 : i32, i32, i32, i32
  }
  func.func @transform_3(%arg0: i32) -> (i32, i32, i32, i32) {
    %c0_i32 = arith.constant 0 : i32
    %c0_i32_0 = arith.constant 0 : i32
    %c0_i32_1 = arith.constant 0 : i32
    %c0_i32_2 = arith.constant 0 : i32
    return %arg0, %c0_i32, %c0_i32_0, %c0_i32_1 : i32, i32, i32, i32
  }
  func.func @transform_4(%arg0: i32) -> (i32, i32) {
    %c0_i32 = arith.constant 0 : i32
    %c0_i32_0 = arith.constant 0 : i32
    %c0_i32_1 = arith.constant 0 : i32
    return %c0_i32, %c0_i32_0 : i32, i32
  }
  func.func @transform_5(%arg0: i32) -> (i32, i32) {
    %c0_i32 = arith.constant 0 : i32
    %c0_i32_0 = arith.constant 0 : i32
    %c0_i32_1 = arith.constant 0 : i32
    return %c0_i32, %c0_i32_0 : i32, i32
  }
  func.func @transform_6(%arg0: i32) -> (i32, i32) {
    %c0_i32 = arith.constant 0 : i32
    %c0_i32_0 = arith.constant 0 : i32
    %c0_i32_1 = arith.constant 0 : i32
    return %c0_i32, %c0_i32_0 : i32, i32
  }
  func.func @transform_7(%arg0: i32) -> (i32, i32) {
    %c0_i32 = arith.constant 0 : i32
    %c0_i32_0 = arith.constant 0 : i32
    %c0_i32_1 = arith.constant 0 : i32
    return %c0_i32, %c0_i32_0 : i32, i32
  }
  func.func @transform_8(%arg0: i32) -> (i32, i32) {
    %c0_i32 = arith.constant 0 : i32
    %c0_i32_0 = arith.constant 0 : i32
    %c0_i32_1 = arith.constant 0 : i32
    return %c0_i32, %c0_i32_0 : i32, i32
  }
  func.func @transform_9(%arg0: i32) -> (i32, i32) {
    %c0_i32 = arith.constant 0 : i32
    %c0_i32_0 = arith.constant 0 : i32
    %c0_i32_1 = arith.constant 0 : i32
    return %c0_i32, %c0_i32_0 : i32, i32
  }
  func.func @transform_10(%arg0: i32) -> (i32, i32) {
    %c0_i32 = arith.constant 0 : i32
    %c0_i32_0 = arith.constant 0 : i32
    %c0_i32_1 = arith.constant 0 : i32
    return %c0_i32, %c0_i32_0 : i32, i32
  }
  func.func @transform_11(%arg0: i32) -> (i32, i32) {
    %c0_i32 = arith.constant 0 : i32
    %c0_i32_0 = arith.constant 0 : i32
    %c0_i32_1 = arith.constant 0 : i32
    return %c0_i32, %c0_i32_0 : i32, i32
  }
  func.func @transform_12(%arg0: i32) -> (i32, i32, i32) {
    %c0_i32 = arith.constant 0 : i32
    %c0_i32_0 = arith.constant 0 : i32
    %c0_i32_1 = arith.constant 0 : i32
    return %arg0, %c0_i32, %c0_i32_0 : i32, i32, i32
  }
}

</mosaic_0001>

<llo_original>
// kernel: tpu_custom_call.1
$region0: #{tpu_custom_call.1}
  #allocation0 [shape = 'u32[]', space=smem, size = 0x4, offset = 0x4, fixed_abs, tag = 'smem constant byte address 0x4 - core index']
  #allocation1 [shape = 'u32[72,128]{1,0:T(1,128)}', space=vmem, size = 0x9000, scoped, tag = 'internal scratch']
  %s0 = inlined_call_operand.vmem [shape: f32[2,16,32], index: 0, kind: input, shape index: {}]
  %s1 = inlined_call_operand.vmem [shape: f32[16,16], index: 1, kind: input, shape index: {}]
  %s2 = inlined_call_operand.hbm [shape: f32[2,4,16,16], index: 2, kind: input, shape index: {}]
  %s3 = inlined_call_operand.hbm [shape: f32[2,4,16,16], index: 3, kind: input, shape index: {}]
  %s4 = inlined_call_operand.vmem [shape: f32[32,64], index: 4, kind: input, shape index: {}]
  %s5 = inlined_call_operand.vmem [shape: f32[4,64], index: 5, kind: input, shape index: {}]
  %s6 = inlined_call_operand.vmem [shape: f32[4,64], index: 6, kind: input, shape index: {}]
  %s7 = inlined_call_operand.vmem [shape: f32[64,16], index: 7, kind: input, shape index: {}]
  %s8 = inlined_call_operand.vmem [shape: f32[16,32], index: 8, kind: input, shape index: {}]
  %s9 = inlined_call_operand.hbm [shape: f32[4,32], index: 9, kind: input, shape index: {}]
  %s10 = inlined_call_operand.hbm [shape: f32[4,32], index: 10, kind: input, shape index: {}]
  %s11 = inlined_call_operand.vmem [shape: f32[32,8], index: 11, kind: input, shape index: {}]
  %s12 = inlined_call_operand.vmem [shape: f32[2,16,8], index: 12, kind: output, shape index: {}]
  %s13 = sld [smem:[#allocation0]]
  $region97: #{tpu_custom_call.1} parent=0
    _
  %s15 = ssub.s32 1, %s13
  %s16 = scalar_select 0, %s15, %s13
  $region1: #{tpu_custom_call.1} parent=0
    #allocation2 [shape = 'u8[65536]{0}', space=vmem, size = 0x10000, scoped, tag = 'input window, operand 2']
    #allocation3 [shape = 's32[2]{0}', space=sflag, size = 0x8, scoped, tag = 'scoped memory for tpu_custom_call.1']
    #allocation4 [shape = 'u8[65536]{0}', space=vmem, size = 0x10000, scoped, tag = 'input window, operand 3']
    #allocation5 [shape = 's32[2]{0}', space=sflag, size = 0x8, scoped, tag = 'scoped memory for tpu_custom_call.1']
    #allocation6 [shape = 'u8[2048]{0}', space=vmem, size = 0x800, scoped, tag = 'input window, operand 9, single buffered']
    #allocation7 [shape = 'u8[2048]{0}', space=vmem, size = 0x800, scoped, tag = 'input window, operand 10, single buffered']
    #allocation8 [shape = 's32[1]{0}', space=sflag, size = 0x4, scoped, tag = 'scoped memory for tpu_custom_call.1']
    %17 = vsyncpa [#allocation3], 0
    %s18 = scalar_lea.sflag [#allocation3], 1
    %19 = vsyncpa %s18, 0
    %20 = vsyncpa [#allocation5], 0
    %s21 = scalar_lea.sflag [#allocation5], 1
    %22 = vsyncpa %s21, 0
    %23 = vsyncpa [#allocation8], 0
    loop: start=0, step=1, limit=4
    $region2: #{tpu_custom_call.1} parent=1 // loop_pre_header
      _
    $region3: #{tpu_custom_call.1} parent=1 // loop_header
      %s25 = sphi 0, %s29
      %p26 = scmp.ge.s32.totalorder %s25, 4
      %s35 = sphi 0, %s37
      %s38 = sphi 0, %s35
      %s39 = sphi 0, %s38
      %s55 = sphi 0, %s39
      %s59 = sphi 0, %s59
      %s61 = sphi 0, %s59
      %s62 = sphi 0, %s61
      %s76 = sphi 0, %s62
      %s82 = sphi 0, %s84
      %s85 = sphi 0, %s82
      %s86 = sphi 0, %s85
      %s102 = sphi 0, %s86
      %s108 = sphi 0, %s110
      %s111 = sphi 0, %s108
      %s112 = sphi 0, %s111
      %s128 = sphi 0, %s112
      %s132 = sphi 0, %s132
      %s134 = sphi 0, %s132
      %s135 = sphi 0, %s134
      %s149 = sphi 0, %s135
      %s153 = sphi 0, %s153
      %s155 = sphi 0, %s153
      %s156 = sphi 0, %s155
      %s170 = sphi 0, %s156
      %s174 = sphi 0, %s174
      %s176 = sphi 0, %s174
      %s177 = sphi 0, %s176
      %s191 = sphi 0, %s177
      %s195 = sphi 0, %s195
      %s197 = sphi 0, %s195
      %s198 = sphi 0, %s197
      %s212 = sphi 0, %s198
      %s216 = sphi 0, %s216
      %s218 = sphi 0, %s216
      %s219 = sphi 0, %s218
      %s233 = sphi 0, %s219
      %s237 = sphi 0, %s237
      %s239 = sphi 0, %s237
      %s240 = sphi 0, %s239
      %s254 = sphi 0, %s240
      %s258 = sphi 0, %s258
      %s260 = sphi 0, %s258
      %s261 = sphi 0, %s260
      %s275 = sphi 0, %s261
      %s279 = sphi 0, %s279
      %s281 = sphi 0, %s279
      %s282 = sphi 0, %s281
      %s296 = sphi 0, %s282
      %s302 = sphi 0, %s304
      %s305 = sphi 0, %s302
      %s306 = sphi 0, %s305
      %s322 = sphi 0, %s306
    $region4: #{tpu_custom_call.1} parent=1 // loop_header_branch
      %28 = sbr.rel (%p26) target = $region8
    $region5: #{tpu_custom_call.1} parent=1 // loop_body
      %s30 = ssub.s32 %s25, 1
      %s31 = ssub.s32 %s25, 2
      %s32 = sadd.s32 %s25, 1
      %s33 = ssub.s32 %s25, %s32
      %p34 = scmp.eq.s32.totalorder %s33, 0
      %s36 = sadd.s32 %s35, 1
      %s37 = scalar_select %p34, %s35, %s36
      %p40 = pneg %p34
      %p41 = scmp.eq.s32.totalorder %s25, 1
      %p42 = por %p40, %p41
      %p43 = scmp.ne.s32.totalorder %s35, %s38
      %p44 = scmp.eq.s32.totalorder %s25, 0
      %p45 = por %p43, %p44
      %p46 = scmp.ne.s32.totalorder %s35, %s38
      %p47 = scmp.eq.s32.totalorder %s30, 1
      %p48 = por %p46, %p47
      %p49 = scmp.ne.s32.totalorder %s38, %s39
      %p50 = scmp.eq.s32.totalorder %s30, 0
      %p51 = por %p49, %p50
      %p52 = scmp.ne.s32.totalorder %s38, %s39
      %p53 = scmp.eq.s32.totalorder %s31, 1
      %p54 = por %p52, %p53
      %p56 = scmp.ne.s32.totalorder %s39, %s55
      %p57 = scmp.eq.s32.totalorder %s31, 0
      %p58 = por %p56, %p57
      %s60 = sadd.s32 %s59, 1
      %p63 = scmp.eq.s32.totalorder %s25, 1
      %p64 = scmp.ne.s32.totalorder %s59, %s61
      %p65 = scmp.eq.s32.totalorder %s25, 0
      %p66 = por %p64, %p65
      %p67 = scmp.ne.s32.totalorder %s59, %s61
      %p68 = scmp.eq.s32.totalorder %s30, 1
      %p69 = por %p67, %p68
      %p70 = scmp.ne.s32.totalorder %s61, %s62
      %p71 = scmp.eq.s32.totalorder %s30, 0
      %p72 = por %p70, %p71
      %p73 = scmp.ne.s32.totalorder %s61, %s62
      %p74 = scmp.eq.s32.totalorder %s31, 1
      %p75 = por %p73, %p74
      %p77 = scmp.ne.s32.totalorder %s62, %s76
      %p78 = scmp.eq.s32.totalorder %s31, 0
      %p79 = por %p77, %p78
      %s80 = ssub.s32 %s25, %s32
      %p81 = scmp.eq.s32.totalorder %s80, 0
      %s83 = sadd.s32 %s82, 1
      %s84 = scalar_select %p81, %s82, %s83
      %p87 = pneg %p81
      %p88 = scmp.eq.s32.totalorder %s25, 1
      %p89 = por %p87, %p88
      %p90 = scmp.ne.s32.totalorder %s82, %s85
      %p91 = scmp.eq.s32.totalorder %s25, 0
      %p92 = por %p90, %p91
      %p93 = scmp.ne.s32.totalorder %s82, %s85
      %p94 = scmp.eq.s32.totalorder %s30, 1
      %p95 = por %p93, %p94
      %p96 = scmp.ne.s32.totalorder %s85, %s86
      %p97 = scmp.eq.s32.totalorder %s30, 0
      %p98 = por %p96, %p97
      %p99 = scmp.ne.s32.totalorder %s85, %s86
      %p100 = scmp.eq.s32.totalorder %s31, 1
      %p101 = por %p99, %p100
      %p103 = scmp.ne.s32.totalorder %s86, %s102
      %p104 = scmp.eq.s32.totalorder %s31, 0
      %p105 = por %p103, %p104
      %s106 = ssub.s32 %s25, %s32
      %p107 = scmp.eq.s32.totalorder %s106, 0
      %s109 = sadd.s32 %s108, 1
      %s110 = scalar_select %p107, %s108, %s109
      %p113 = pneg %p107
      %p114 = scmp.eq.s32.totalorder %s25, 1
      %p115 = por %p113, %p114
      %p116 = scmp.ne.s32.totalorder %s108, %s111
      %p117 = scmp.eq.s32.totalorder %s25, 0
      %p118 = por %p116, %p117
      %p119 = scmp.ne.s32.totalorder %s108, %s111
      %p120 = scmp.eq.s32.totalorder %s30, 1
      %p121 = por %p119, %p120
      %p122 = scmp.ne.s32.totalorder %s111, %s112
      %p123 = scmp.eq.s32.totalorder %s30, 0
      %p124 = por %p122, %p123
      %p125 = scmp.ne.s32.totalorder %s111, %s112
      %p126 = scmp.eq.s32.totalorder %s31, 1
      %p127 = por %p125, %p126
      %p129 = scmp.ne.s32.totalorder %s112, %s128
      %p130 = scmp.eq.s32.totalorder %s31, 0
      %p131 = por %p129, %p130
      %s133 = sadd.s32 %s132, 1
      %p136 = scmp.eq.s32.totalorder %s25, 1
      %p137 = scmp.ne.s32.totalorder %s132, %s134
      %p138 = scmp.eq.s32.totalorder %s25, 0
      %p139 = por %p137, %p138
      %p140 = scmp.ne.s32.totalorder %s132, %s134
      %p141 = scmp.eq.s32.totalorder %s30, 1
      %p142 = por %p140, %p141
      %p143 = scmp.ne.s32.totalorder %s134, %s135
      %p144 = scmp.eq.s32.totalorder %s30, 0
      %p145 = por %p143, %p144
      %p146 = scmp.ne.s32.totalorder %s134, %s135
      %p147 = scmp.eq.s32.totalorder %s31, 1
      %p148 = por %p146, %p147
      %p150 = scmp.ne.s32.totalorder %s135, %s149
      %p151 = scmp.eq.s32.totalorder %s31, 0
      %p152 = por %p150, %p151
      %s154 = sadd.s32 %s153, 1
      %p157 = scmp.eq.s32.totalorder %s25, 1
      %p158 = scmp.ne.s32.totalorder %s153, %s155
      %p159 = scmp.eq.s32.totalorder %s25, 0
      %p160 = por %p158, %p159
      %p161 = scmp.ne.s32.totalorder %s153, %s155
      %p162 = scmp.eq.s32.totalorder %s30, 1
      %p163 = por %p161, %p162
      %p164 = scmp.ne.s32.totalorder %s155, %s156
      %p165 = scmp.eq.s32.totalorder %s30, 0
      %p166 = por %p164, %p165
      %p167 = scmp.ne.s32.totalorder %s155, %s156
      %p168 = scmp.eq.s32.totalorder %s31, 1
      %p169 = por %p167, %p168
      %p171 = scmp.ne.s32.totalorder %s156, %s170
      %p172 = scmp.eq.s32.totalorder %s31, 0
      %p173 = por %p171, %p172
      %s175 = sadd.s32 %s174, 1
      %p178 = scmp.eq.s32.totalorder %s25, 1
      %p179 = scmp.ne.s32.totalorder %s174, %s176
      %p180 = scmp.eq.s32.totalorder %s25, 0
      %p181 = por %p179, %p180
      %p182 = scmp.ne.s32.totalorder %s174, %s176
      %p183 = scmp.eq.s32.totalorder %s30, 1
      %p184 = por %p182, %p183
      %p185 = scmp.ne.s32.totalorder %s176, %s177
      %p186 = scmp.eq.s32.totalorder %s30, 0
      %p187 = por %p185, %p186
      %p188 = scmp.ne.s32.totalorder %s176, %s177
      %p189 = scmp.eq.s32.totalorder %s31, 1
      %p190 = por %p188, %p189
      %p192 = scmp.ne.s32.totalorder %s177, %s191
      %p193 = scmp.eq.s32.totalorder %s31, 0
      %p194 = por %p192, %p193
      %s196 = sadd.s32 %s195, 1
      %p199 = scmp.eq.s32.totalorder %s25, 1
      %p200 = scmp.ne.s32.totalorder %s195, %s197
      %p201 = scmp.eq.s32.totalorder %s25, 0
      %p202 = por %p200, %p201
      %p203 = scmp.ne.s32.totalorder %s195, %s197
      %p204 = scmp.eq.s32.totalorder %s30, 1
      %p205 = por %p203, %p204
      %p206 = scmp.ne.s32.totalorder %s197, %s198
      %p207 = scmp.eq.s32.totalorder %s30, 0
      %p208 = por %p206, %p207
      %p209 = scmp.ne.s32.totalorder %s197, %s198
      %p210 = scmp.eq.s32.totalorder %s31, 1
      %p211 = por %p209, %p210
      %p213 = scmp.ne.s32.totalorder %s198, %s212
      %p214 = scmp.eq.s32.totalorder %s31, 0
      %p215 = por %p213, %p214
      %s217 = sadd.s32 %s216, 1
      %p220 = scmp.eq.s32.totalorder %s25, 1
      %p221 = scmp.ne.s32.totalorder %s216, %s218
      %p222 = scmp.eq.s32.totalorder %s25, 0
      %p223 = por %p221, %p222
      %p224 = scmp.ne.s32.totalorder %s216, %s218
      %p225 = scmp.eq.s32.totalorder %s30, 1
      %p226 = por %p224, %p225
      %p227 = scmp.ne.s32.totalorder %s218, %s219
      %p228 = scmp.eq.s32.totalorder %s30, 0
      %p229 = por %p227, %p228
      %p230 = scmp.ne.s32.totalorder %s218, %s219
      %p231 = scmp.eq.s32.totalorder %s31, 1
      %p232 = por %p230, %p231
      %p234 = scmp.ne.s32.totalorder %s219, %s233
      %p235 = scmp.eq.s32.totalorder %s31, 0
      %p236 = por %p234, %p235
      %s238 = sadd.s32 %s237, 1
      %p241 = scmp.eq.s32.totalorder %s25, 1
      %p242 = scmp.ne.s32.totalorder %s237, %s239
      %p243 = scmp.eq.s32.totalorder %s25, 0
      %p244 = por %p242, %p243
      %p245 = scmp.ne.s32.totalorder %s237, %s239
      %p246 = scmp.eq.s32.totalorder %s30, 1
      %p247 = por %p245, %p246
      %p248 = scmp.ne.s32.totalorder %s239, %s240
      %p249 = scmp.eq.s32.totalorder %s30, 0
      %p250 = por %p248, %p249
      %p251 = scmp.ne.s32.totalorder %s239, %s240
      %p252 = scmp.eq.s32.totalorder %s31, 1
      %p253 = por %p251, %p252
      %p255 = scmp.ne.s32.totalorder %s240, %s254
      %p256 = scmp.eq.s32.totalorder %s31, 0
      %p257 = por %p255, %p256
      %s259 = sadd.s32 %s258, 1
      %p262 = scmp.eq.s32.totalorder %s25, 1
      %p263 = scmp.ne.s32.totalorder %s258, %s260
      %p264 = scmp.eq.s32.totalorder %s25, 0
      %p265 = por %p263, %p264
      %p266 = scmp.ne.s32.totalorder %s258, %s260
      %p267 = scmp.eq.s32.totalorder %s30, 1
      %p268 = por %p266, %p267
      %p269 = scmp.ne.s32.totalorder %s260, %s261
      %p270 = scmp.eq.s32.totalorder %s30, 0
      %p271 = por %p269, %p270
      %p272 = scmp.ne.s32.totalorder %s260, %s261
      %p273 = scmp.eq.s32.totalorder %s31, 1
      %p274 = por %p272, %p273
      %p276 = scmp.ne.s32.totalorder %s261, %s275
      %p277 = scmp.eq.s32.totalorder %s31, 0
      %p278 = por %p276, %p277
      %s280 = sadd.s32 %s279, 1
      %p283 = scmp.eq.s32.totalorder %s25, 1
      %p284 = scmp.ne.s32.totalorder %s279, %s281
      %p285 = scmp.eq.s32.totalorder %s25, 0
      %p286 = por %p284, %p285
      %p287 = scmp.ne.s32.totalorder %s279, %s281
      %p288 = scmp.eq.s32.totalorder %s30, 1
      %p289 = por %p287, %p288
      %p290 = scmp.ne.s32.totalorder %s281, %s282
      %p291 = scmp.eq.s32.totalorder %s30, 0
      %p292 = por %p290, %p291
      %p293 = scmp.ne.s32.totalorder %s281, %s282
      %p294 = scmp.eq.s32.totalorder %s31, 1
      %p295 = por %p293, %p294
      %p297 = scmp.ne.s32.totalorder %s282, %s296
      %p298 = scmp.eq.s32.totalorder %s31, 0
      %p299 = por %p297, %p298
      %s300 = ssub.s32 %s25, %s32
      %p301 = scmp.eq.s32.totalorder %s300, 0
      %s303 = sadd.s32 %s302, 1
      %s304 = scalar_select %p301, %s302, %s303
      %p307 = pneg %p301
      %p308 = scmp.eq.s32.totalorder %s25, 1
      %p309 = por %p307, %p308
      %p310 = scmp.ne.s32.totalorder %s302, %s305
      %p311 = scmp.eq.s32.totalorder %s25, 0
      %p312 = por %p310, %p311
      %p313 = scmp.ne.s32.totalorder %s302, %s305
      %p314 = scmp.eq.s32.totalorder %s30, 1
      %p315 = por %p313, %p314
      %p316 = scmp.ne.s32.totalorder %s305, %s306
      %p317 = scmp.eq.s32.totalorder %s30, 0
      %p318 = por %p316, %p317
      %p319 = scmp.ne.s32.totalorder %s305, %s306
      %p320 = scmp.eq.s32.totalorder %s31, 1
      %p321 = por %p319, %p320
      %p323 = scmp.ne.s32.totalorder %s306, %s322
      %p324 = scmp.eq.s32.totalorder %s31, 0
      %p325 = por %p323, %p324
      %p326 = scmp.le.s32.totalorder 1, %s25
      %p327 = scmp.lt.s32.totalorder %s25, 3
      %p328 = pnand %p326, %p327
      %p329 = pneg %p328
      // Predicated region
      $region9: #{tpu_custom_call.1} parent=5 // pred_check
        _
      $region10: #{tpu_custom_call.1} parent=5 // pred_check_branch
        %331 = sbr.rel (%p328) target = $region12
      $region11: #{tpu_custom_call.1} parent=5 // pred_region
        %s332 = ssub.s32 %s25, 1
        // Predicated region
        $region13: #{tpu_custom_call.1} parent=11 // pred_check
          %p333 = pneg %p72
        $region14: #{tpu_custom_call.1} parent=11 // pred_check_branch
          %335 = sbr.rel (%p333) target = $region16
        $region15: #{tpu_custom_call.1} parent=11 // pred_region
          _
        $region16: #{tpu_custom_call.1} parent=11 // pred_fallthru
          _
        // Predicated region
        $region17: #{tpu_custom_call.1} parent=11 // pred_check
          %p336 = pneg %p145
        $region18: #{tpu_custom_call.1} parent=11 // pred_check_branch
          %338 = sbr.rel (%p336) target = $region20
        $region19: #{tpu_custom_call.1} parent=11 // pred_region
          _
        $region20: #{tpu_custom_call.1} parent=11 // pred_fallthru
          _
        // Predicated region
        $region21: #{tpu_custom_call.1} parent=11 // pred_check
          %p339 = pneg %p166
        $region22: #{tpu_custom_call.1} parent=11 // pred_check_branch
          %341 = sbr.rel (%p339) target = $region24
        $region23: #{tpu_custom_call.1} parent=11 // pred_region
          _
        $region24: #{tpu_custom_call.1} parent=11 // pred_fallthru
          _
        // Predicated region
        $region25: #{tpu_custom_call.1} parent=11 // pred_check
          %p342 = pneg %p187
        $region26: #{tpu_custom_call.1} parent=11 // pred_check_branch
          %344 = sbr.rel (%p342) target = $region28
        $region27: #{tpu_custom_call.1} parent=11 // pred_region
          _
        $region28: #{tpu_custom_call.1} parent=11 // pred_fallthru
          _
        // Predicated region
        $region29: #{tpu_custom_call.1} parent=11 // pred_check
          %p345 = pneg %p208
        $region30: #{tpu_custom_call.1} parent=11 // pred_check_branch
          %347 = sbr.rel (%p345) target = $region32
        $region31: #{tpu_custom_call.1} parent=11 // pred_region
          _
        $region32: #{tpu_custom_call.1} parent=11 // pred_fallthru
          _
        // Predicated region
        $region33: #{tpu_custom_call.1} parent=11 // pred_check
          %p348 = pneg %p229
        $region34: #{tpu_custom_call.1} parent=11 // pred_check_branch
          %350 = sbr.rel (%p348) target = $region36
        $region35: #{tpu_custom_call.1} parent=11 // pred_region
          _
        $region36: #{tpu_custom_call.1} parent=11 // pred_fallthru
          _
        // Predicated region
        $region37: #{tpu_custom_call.1} parent=11 // pred_check
          %p351 = pneg %p250
        $region38: #{tpu_custom_call.1} parent=11 // pred_check_branch
          %353 = sbr.rel (%p351) target = $region40
        $region39: #{tpu_custom_call.1} parent=11 // pred_region
          %355 = vsyncadd [#allocation5], 0
          %s357 = sshll.u32 %s9, 4
          %s358 = int_to_ptr.hbm [resolvable:$true] %s357
          %s359 = sshll.u32 [#allocation6], 4
          %s360 = int_to_ptr.vmem [resolvable:$true] %s359
          %362 = dma.hbm_to_vmem [thread:$0]  %s358, 64, %s360, [#allocation5]
        $region40: #{tpu_custom_call.1} parent=11 // pred_fallthru
          _
        // Predicated region
        $region41: #{tpu_custom_call.1} parent=11 // pred_check
          %p363 = pneg %p271
        $region42: #{tpu_custom_call.1} parent=11 // pred_check_branch
          %365 = sbr.rel (%p363) target = $region44
        $region43: #{tpu_custom_call.1} parent=11 // pred_region
          %367 = vsyncadd [#allocation8], 0
          %s369 = sshll.u32 %s10, 4
          %s370 = int_to_ptr.hbm [resolvable:$true] %s369
          %s371 = sshll.u32 [#allocation7], 4
          %s372 = int_to_ptr.vmem [resolvable:$true] %s371
          %374 = dma.hbm_to_vmem [thread:$0]  %s370, 64, %s372, [#allocation8]
        $region44: #{tpu_custom_call.1} parent=11 // pred_fallthru
          _
        // Predicated region
        $region45: #{tpu_custom_call.1} parent=11 // pred_check
          %p375 = pneg %p292
        $region46: #{tpu_custom_call.1} parent=11 // pred_check_branch
          %377 = sbr.rel (%p375) target = $region48
        $region47: #{tpu_custom_call.1} parent=11 // pred_region
          _
        $region48: #{tpu_custom_call.1} parent=11 // pred_fallthru
          _
      $region12: #{tpu_custom_call.1} parent=5 // pred_fallthru
        _
      %p378 = scmp.lt.s32.totalorder %s25, 2
      // Predicated region
      $region49: #{tpu_custom_call.1} parent=5 // pred_check
        %p379 = pneg %p378
      $region50: #{tpu_custom_call.1} parent=5 // pred_check_branch
        %381 = sbr.rel (%p379) target = $region52
      $region51: #{tpu_custom_call.1} parent=5 // pred_region
        // Predicated region
        $region53: #{tpu_custom_call.1} parent=51 // pred_check
          %p382 = pneg %p45
        $region54: #{tpu_custom_call.1} parent=51 // pred_check_branch
          %384 = sbr.rel (%p382) target = $region56
        $region55: #{tpu_custom_call.1} parent=51 // pred_region
          %p385 = scmp.lt.s32.totalorder %s25, 1
          %s386 = scalar_select %p385, %s25, 1
          %s387 = smul.addr %s386, 2
          %s388 = smul.addr %s387, 8
          %s389 = scalar_lea.vmem %s0, %s388
        $region56: #{tpu_custom_call.1} parent=51 // pred_fallthru
          _
        // Predicated region
        $region57: #{tpu_custom_call.1} parent=51 // pred_check
          %p390 = pneg %p92
        $region58: #{tpu_custom_call.1} parent=51 // pred_check_branch
          %392 = sbr.rel (%p390) target = $region60
        $region59: #{tpu_custom_call.1} parent=51 // pred_region
          %s393 = sand.u32 %s82, 1
          %s394 = scalar_lea.sflag [#allocation3], %s393
          %s395 = sand.u32 %s82, 1
          %s396 = smul.addr %s395, 64
          %s397 = scalar_lea.vmem [#allocation2], %s396
          %399 = vsyncadd %s394, 0
          %s400 = smul.addr %s25, 8
          %s401 = smul.addr %s400, 8
          %s402 = scalar_lea.hbm %s2, %s401
          %s403 = sshll.u32 %s402, 4
          %s404 = int_to_ptr.hbm [resolvable:$true] %s403
          %s405 = sshll.u32 %s397, 4
          %s406 = int_to_ptr.vmem [resolvable:$true] %s405
          %411 = dma.hbm_to_vmem [thread:$0]  %s404, 1024, %s406, %s394, 128, 128, 8
        $region60: #{tpu_custom_call.1} parent=51 // pred_fallthru
          _
        // Predicated region
        $region61: #{tpu_custom_call.1} parent=51 // pred_check
          %p412 = pneg %p118
        $region62: #{tpu_custom_call.1} parent=51 // pred_check_branch
          %414 = sbr.rel (%p412) target = $region64
        $region63: #{tpu_custom_call.1} parent=51 // pred_region
          %s415 = sand.u32 %s25, 1
          %s416 = scalar_lea.sflag [#allocation5], %s415
          %s417 = sand.u32 %s108, 1
          %s418 = smul.addr %s417, 64
          %s419 = scalar_lea.vmem [#allocation4], %s418
          %421 = vsyncadd %s416, 0
          %s422 = smul.addr %s25, 8
          %s423 = smul.addr %s422, 8
          %s424 = scalar_lea.hbm %s3, %s423
          %s425 = sshll.u32 %s424, 4
          %s426 = int_to_ptr.hbm [resolvable:$true] %s425
          %s427 = sshll.u32 %s419, 4
          %s428 = int_to_ptr.vmem [resolvable:$true] %s427
          %433 = dma.hbm_to_vmem [thread:$0]  %s426, 1024, %s428, %s416, 128, 128, 8
        $region64: #{tpu_custom_call.1} parent=51 // pred_fallthru
          _
      $region52: #{tpu_custom_call.1} parent=5 // pred_fallthru
        _
      %p434 = scmp.le.s32.totalorder 1, %s25
      %p435 = scmp.lt.s32.totalorder %s25, 3
      %p436 = pnand %p434, %p435
      %p437 = pneg %p436
      // Predicated region
      $region65: #{tpu_custom_call.1} parent=5 // pred_check
        _
      $region66: #{tpu_custom_call.1} parent=5 // pred_check_branch
        %439 = sbr.rel (%p436) target = $region68
      $region67: #{tpu_custom_call.1} parent=5 // pred_region
        %s440 = ssub.s32 %s25, 1
        %s441 = sand.u32 %s85, 1
        %s442 = scalar_lea.sflag [#allocation3], %s441
        %s443 = sand.u32 %s85, 1
        %s444 = smul.addr %s443, 64
        %s445 = scalar_lea.vmem [#allocation2], %s444
        // Predicated region
        $region69: #{tpu_custom_call.1} parent=67 // pred_check
          %p446 = pneg %p98
        $region70: #{tpu_custom_call.1} parent=67 // pred_check_branch
          %448 = sbr.rel (%p446) target = $region72
        $region71: #{tpu_custom_call.1} parent=67 // pred_region
          %450 = dma.done %s442, 1024
        $region72: #{tpu_custom_call.1} parent=67 // pred_fallthru
          _
        %s451 = sand.u32 %s30, 1
        %s452 = scalar_lea.sflag [#allocation5], %s451
        %s453 = sand.u32 %s111, 1
        %s454 = smul.addr %s453, 64
        %s455 = scalar_lea.vmem [#allocation4], %s454
        // Predicated region
        $region73: #{tpu_custom_call.1} parent=67 // pred_check
          %p456 = pneg %p124
        $region74: #{tpu_custom_call.1} parent=67 // pred_check_branch
          %458 = sbr.rel (%p456) target = $region76
        $region75: #{tpu_custom_call.1} parent=67 // pred_region
          %460 = dma.done %s452, 1024
        $region76: #{tpu_custom_call.1} parent=67 // pred_fallthru
          _
        // Predicated region
        $region77: #{tpu_custom_call.1} parent=67 // pred_check
          %p461 = pneg %p250
        $region78: #{tpu_custom_call.1} parent=67 // pred_check_branch
          %463 = sbr.rel (%p461) target = $region80
        $region79: #{tpu_custom_call.1} parent=67 // pred_region
          %465 = dma.done [#allocation5], 64
        $region80: #{tpu_custom_call.1} parent=67 // pred_fallthru
          _
        // Predicated region
        $region81: #{tpu_custom_call.1} parent=67 // pred_check
          %p466 = pneg %p271
        $region82: #{tpu_custom_call.1} parent=67 // pred_check_branch
          %468 = sbr.rel (%p466) target = $region84
        $region83: #{tpu_custom_call.1} parent=67 // pred_region
          %470 = dma.done [#allocation8], 64
        $region84: #{tpu_custom_call.1} parent=67 // pred_fallthru
          _
        %p471 = scmp.lt.s32.totalorder %s30, 1
        %s472 = scalar_select %p471, %s30, 1
        %s473 = smul.addr %s472, 2
        %s474 = smul.addr %s473, 8
        %s475 = scalar_lea.vmem %s0, %s474
        %p476 = pneg %p51
        %p477 = pneg %p48
        %p478 = pneg %p72
        %p479 = pneg %p69
        %s480 = sand.u32 %s85, 1
        %s481 = scalar_lea.sflag [#allocation3], %s480
        %s482 = sand.u32 %s85, 1
        %s483 = smul.addr %s482, 64
        %s484 = scalar_lea.vmem [#allocation2], %s483
        %p485 = pneg %p98
        %p486 = pneg %p95
        %s487 = sand.u32 %s30, 1
        %s488 = scalar_lea.sflag [#allocation5], %s487
        %s489 = sand.u32 %s111, 1
        %s490 = smul.addr %s489, 64
        %s491 = scalar_lea.vmem [#allocation4], %s490
        %p492 = pneg %p124
        %p493 = pneg %p121
        %p494 = pneg %p145
        %p495 = pneg %p142
        %p496 = pneg %p166
        %p497 = pneg %p163
        %p498 = pneg %p187
        %p499 = pneg %p184
        %p500 = pneg %p208
        %p501 = pneg %p205
        %p502 = pneg %p229
        %p503 = pneg %p226
        %p504 = pneg %p250
        %p505 = pneg %p247
        %p506 = pneg %p271
        %p507 = pneg %p268
        %p508 = pneg %p292
        %p509 = pneg %p289
        %p510 = pneg %p318
        %p511 = pneg %p315
        %p512 = scmp.lt.s32.totalorder %s30, 1
        %s513 = scalar_select %p512, %s30, 1
        %s514 = smul.addr %s513, 2
        %s515 = smul.addr %s514, 8
        %s516 = scalar_lea.vmem %s12, %s515
        %p517 = scmp.lt.s32.totalorder %s30, 1
        %s518 = scalar_select %p517, %s30, 1
        %s519 = smul.addr %s518, 2
        %s520 = smul.addr %s519, 8
        %s521 = scalar_lea.vmem %s0, %s520
        %p522 = scmp.lt.s32.totalorder %s30, 1
        %s523 = scalar_select %p522, %s30, 1
        %s524 = smul.addr %s523, 2
        %s525 = smul.addr %s524, 8
        %s526 = scalar_lea.vmem %s12, %s525
        %v527 = vld [vmem:[%s1] sm:$0xff]
        %v528 = vld [vmem:[%s1 + $0x8] sm:$0xff]
        %v529 = vld [vmem:[%s4] sm:$0xff]
        %v530 = vld [vmem:[%s4 + $0x8] sm:$0xff]
        %v531 = vld [vmem:[%s4 + $0x10] sm:$0xff]
        %v532 = vld [vmem:[%s4 + $0x18] sm:$0xff]
        %v533 = vld [vmem:[%s5] sm:$0xf]
        %v534 = vld [vmem:[%s6] sm:$0xf]
        %v535 = vld [vmem:[%s7] sm:$0xff]
        %v536 = vld [vmem:[%s7 + $0x8] sm:$0xff]
        %v537 = vld [vmem:[%s7 + $0x10] sm:$0xff]
        %v538 = vld [vmem:[%s7 + $0x18] sm:$0xff]
        %v539 = vld [vmem:[%s7 + $0x20] sm:$0xff]
        %v540 = vld [vmem:[%s7 + $0x28] sm:$0xff]
        %v541 = vld [vmem:[%s7 + $0x30] sm:$0xff]
        %v542 = vld [vmem:[%s7 + $0x38] sm:$0xff]
        %v543 = vld [vmem:[%s8] sm:$0xff]
        %v544 = vld [vmem:[%s8 + $0x8] sm:$0xff]
        %v545 = vld [vmem:[#allocation6] sm:$0xf]
        %v546 = vld [vmem:[#allocation7] sm:$0xf]
        %v547 = vld [vmem:[%s11] sm:$0xff]
        %v548 = vld [vmem:[%s11 + $0x8] sm:$0xff]
        %v549 = vld [vmem:[%s11 + $0x10] sm:$0xff]
        %v550 = vld [vmem:[%s11 + $0x18] sm:$0xff]
        %v551 = vld [vmem:[%s521] sm:$0xff]
        %v552 = vld [vmem:[%s521 + $0x8] sm:$0xff]
        %vm553 = vcmask 261120
        %v555 = vsel %vm553, %v551, 0
        %v558 = vsel %vm553, %v552, 0
        %560 = vmatpush.msra.mxu0 0.0
        %561 = vmatpush.msra.mxu0 0.0
        %562 = vmatpush.msra.mxu0 0.0
        %563 = vmatpush.msra.mxu0 0.0
        %564 = vmatpush.msra.mxu0 0.0
        %565 = vmatpush.msra.mxu0 0.0
        %566 = vmatpush.msra.mxu0 0.0
        %567 = vmatpush.msra.mxu0 0.0
        %568 = vmatpush.msra.mxu0 0.0
        %569 = vmatpush.msra.mxu0 0.0
        %570 = vmatpush.msra.mxu0 0.0
        %571 = vmatpush.msra.mxu0 0.0
        %572 = vmatpush.msra.mxu0 %v532
        %573 = vmatpush.msra.mxu0 %v531
        %574 = vmatpush.msra.mxu0 %v530
        %575 = vmatpush.msra.mxu0 %v529
        %576 = vmatmul.f32.gmra.mxu0 %v555
        %v577 = vpop.f32.mrf.mxu0
        %v578 = vadd.f32 0.0, %v577
        %579 = vmatmul.f32.gmra.mxu0 %v558
        %v580 = vpop.f32.mrf.mxu0
        %v581 = vadd.f32 0.0, %v580
        %582 = vdwg.mxu0
        %v583 = vld [vmem:[%s445] sm:$0xff]
        %v584 = vld [vmem:[%s445 + $0x8] sm:$0xff]
        %v585 = vld [vmem:[%s445 + $0x10] sm:$0xff]
        %v586 = vld [vmem:[%s445 + $0x18] sm:$0xff]
        %v587 = vld [vmem:[%s445 + $0x20] sm:$0xff]
        %v588 = vld [vmem:[%s445 + $0x28] sm:$0xff]
        %v589 = vld [vmem:[%s445 + $0x30] sm:$0xff]
        %v590 = vld [vmem:[%s445 + $0x38] sm:$0xff]
        %vm591 = vcmask 523264
        %v593 = vsel %vm591, %v533, 0
        %v596 = vsel %vm591, %v578, 0
        %v599 = vsel %vm591, %v581, 0
        %601 = vmatpush.xpose.msra.mxu0 0.0
        %602 = vmatpush.xpose.msra.mxu0 0.0
        %603 = vmatpush.xpose.msra.mxu0 0.0
        %604 = vmatpush.xpose.msra.mxu0 0.0
        %605 = vmatpush.xpose.msra.mxu0 0.0
        %606 = vmatpush.xpose.msra.mxu0 0.0
        %607 = vmatpush.xpose.msra.mxu0 0.0
        %608 = vmatpush.xpose.msra.mxu0 0.0
        %609 = vmatpush.xpose.msra.mxu0 0.0
        %610 = vmatpush.xpose.msra.mxu0 0.0
        %611 = vmatpush.xpose.msra.mxu0 0.0
        %612 = vmatpush.xpose.msra.mxu0 0.0
        %613 = vmatpush.xpose.msra.mxu0 0.0
        %614 = vmatpush.xpose.msra.mxu0 0.0
        %615 = vmatpush.xpose.msra.mxu0 %v599
        %616 = vmatpush.xpose.msra.mxu0 %v596
        %617 = vmatmul.f32.gmra.mxu0 %v593
        %v618 = vpop.f32.mrf.mxu0
        %v619 = vadd.f32 0.0, %v618
        %620 = vdwg.mxu0
        %v622 = vsel %vm591, %v534, 0
        %624 = vmatpush.xpose.msra.mxu0 0.0
        %625 = vmatpush.xpose.msra.mxu0 0.0
        %626 = vmatpush.xpose.msra.mxu0 0.0
        %627 = vmatpush.xpose.msra.mxu0 0.0
        %628 = vmatpush.xpose.msra.mxu0 0.0
        %629 = vmatpush.xpose.msra.mxu0 0.0
        %630 = vmatpush.xpose.msra.mxu0 0.0
        %631 = vmatpush.xpose.msra.mxu0 0.0
        %632 = vmatpush.xpose.msra.mxu0 0.0
        %633 = vmatpush.xpose.msra.mxu0 0.0
        %634 = vmatpush.xpose.msra.mxu0 0.0
        %635 = vmatpush.xpose.msra.mxu0 0.0
        %636 = vmatpush.xpose.msra.mxu0 0.0
        %637 = vmatpush.xpose.msra.mxu0 0.0
        %638 = vmatpush.xpose.msra.mxu0 %v599
        %639 = vmatpush.xpose.msra.mxu0 %v596
        %640 = vmatmul.f32.gmra.mxu0 %v622
        %v641 = vpop.f32.mrf.mxu0
        %v642 = vadd.f32 0.0, %v641
        %643 = vdwg.mxu0
        %v644 = vperm.slane %v619, 0
        %v645 = vlaneseq
        %v646 = vshrl.u32 %v645, 7
        %648 = vset.pattern.permute.xlu0 %v646
        %649 = vperm.xlu0 %648, %v644
        %v650 = vpop.permute.xlu0 %649
        %v651 = vlaneseq
        %v652 = vshrl.u32 %v651, 7
        %v653 = vadd.s32 %v652, 8
        %654 = vset.pattern.permute.xlu0 %v653
        %655 = vperm.xlu0 %654, %v644
        %v656 = vpop.permute.xlu0 %655
        %v657 = vperm.slane %v619, 1
        %v658 = vlaneseq
        %v659 = vshrl.u32 %v658, 7
        %661 = vset.pattern.permute.xlu0 %v659
        %662 = vperm.xlu0 %661, %v657
        %v663 = vpop.permute.xlu0 %662
        %v664 = vlaneseq
        %v665 = vshrl.u32 %v664, 7
        %v666 = vadd.s32 %v665, 8
        %667 = vset.pattern.permute.xlu0 %v666
        %668 = vperm.xlu0 %667, %v657
        %v669 = vpop.permute.xlu0 %668
        %v670 = vperm.slane %v619, 2
        %v671 = vlaneseq
        %v672 = vshrl.u32 %v671, 7
        %674 = vset.pattern.permute.xlu0 %v672
        %675 = vperm.xlu0 %674, %v670
        %v676 = vpop.permute.xlu0 %675
        %v677 = vlaneseq
        %v678 = vshrl.u32 %v677, 7
        %v679 = vadd.s32 %v678, 8
        %680 = vset.pattern.permute.xlu0 %v679
        %681 = vperm.xlu0 %680, %v670
        %v682 = vpop.permute.xlu0 %681
        %v683 = vperm.slane %v619, 3
        %v684 = vlaneseq
        %v685 = vshrl.u32 %v684, 7
        %687 = vset.pattern.permute.xlu0 %v685
        %688 = vperm.xlu0 %687, %v683
        %v689 = vpop.permute.xlu0 %688
        %v690 = vlaneseq
        %v691 = vshrl.u32 %v690, 7
        %v692 = vadd.s32 %v691, 8
        %693 = vset.pattern.permute.xlu0 %v692
        %694 = vperm.xlu0 %693, %v683
        %v695 = vpop.permute.xlu0 %694
        %v697 = vrot.slane %v642, 1
        %v698 = vrot.slane %v642, 2
        %v699 = vrot.slane %v642, 3
        %v700 = vperm.slane %v642, 0
        %v701 = vperm.slane %v697, 0
        %v702 = vperm.slane %v698, 0
        %v703 = vperm.slane %v699, 0
        %v708 = vadd.f32 %v650, %v700
        %v709 = vadd.f32 %v656, %v700
        %v710 = vadd.f32 %v663, %v701
        %v711 = vadd.f32 %v669, %v701
        %v712 = vadd.f32 %v676, %v702
        %v713 = vadd.f32 %v682, %v702
        %v714 = vadd.f32 %v689, %v703
        %v715 = vadd.f32 %v695, %v703
        %v716 = vmul.f32 %v708, %v527
        %v717 = vmul.f32 %v709, %v528
        %v718 = vmul.f32 %v710, %v527
        %v719 = vmul.f32 %v711, %v528
        %v720 = vmul.f32 %v712, %v527
        %v721 = vmul.f32 %v713, %v528
        %v722 = vmul.f32 %v714, %v527
        %v723 = vmul.f32 %v715, %v528
        %v724 = vadd.f32 %v716, %v583
        %v725 = vadd.f32 %v717, %v584
        %v726 = vadd.f32 %v718, %v585
        %v727 = vadd.f32 %v719, %v586
        %v728 = vadd.f32 %v720, %v587
        %v729 = vadd.f32 %v721, %v588
        %v730 = vadd.f32 %v722, %v589
        %v731 = vadd.f32 %v723, %v590
        %vm732 = vcmask 130048
        %v733 = vsel %vm732, %v724, -inf
        %734 = vmax.xlane.f32.xlu0 %v733
        %v735 = vpop.xlane.xlu0 %734
        %v736 = vsel %vm732, %v725, -inf
        %737 = vmax.xlane.f32.xlu0 %v736
        %v738 = vpop.xlane.xlu0 %737
        %v739 = vsel %vm732, %v726, -inf
        %740 = vmax.xlane.f32.xlu0 %v739
        %v741 = vpop.xlane.xlu0 %740
        %v742 = vsel %vm732, %v727, -inf
        %743 = vmax.xlane.f32.xlu0 %v742
        %v744 = vpop.xlane.xlu0 %743
        %v745 = vsel %vm732, %v728, -inf
        %746 = vmax.xlane.f32.xlu0 %v745
        %v747 = vpop.xlane.xlu0 %746
        %v748 = vsel %vm732, %v729, -inf
        %749 = vmax.xlane.f32.xlu0 %v748
        %v750 = vpop.xlane.xlu0 %749
        %v751 = vsel %vm732, %v730, -inf
        %752 = vmax.xlane.f32.xlu0 %v751
        %v753 = vpop.xlane.xlu0 %752
        %v754 = vsel %vm732, %v731, -inf
        %755 = vmax.xlane.f32.xlu0 %v754
        %v756 = vpop.xlane.xlu0 %755
        %v757 = vsub.f32 %v724, %v735
        %v758 = vsub.f32 %v725, %v738
        %v759 = vsub.f32 %v726, %v741
        %v760 = vsub.f32 %v727, %v744
        %v761 = vsub.f32 %v728, %v747
        %v762 = vsub.f32 %v729, %v750
        %v763 = vsub.f32 %v730, %v753
        %v764 = vsub.f32 %v731, %v756
        %v765 = vmul.f32 %v757, 1.442695
        %v766 = vpow.pop %v765
        %v767 = vmul.f32 %v758, 1.442695
        %v768 = vpow.pop %v767
        %v769 = vmul.f32 %v759, 1.442695
        %v770 = vpow.pop %v769
        %v771 = vmul.f32 %v760, 1.442695
        %v772 = vpow.pop %v771
        %v773 = vmul.f32 %v761, 1.442695
        %v774 = vpow.pop %v773
        %v775 = vmul.f32 %v762, 1.442695
        %v776 = vpow.pop %v775
        %v777 = vmul.f32 %v763, 1.442695
        %v778 = vpow.pop %v777
        %v779 = vmul.f32 %v764, 1.442695
        %v780 = vpow.pop %v779
        %v781 = vsel %vm732, %v766, 0.0
        %782 = vadd.xlane.f32.xlu0 %v781
        %v783 = vpop.xlane.xlu0 %782
        %v784 = vsel %vm732, %v768, 0.0
        %785 = vadd.xlane.f32.xlu0 %v784
        %v786 = vpop.xlane.xlu0 %785
        %v787 = vsel %vm732, %v770, 0.0
        %788 = vadd.xlane.f32.xlu0 %v787
        %v789 = vpop.xlane.xlu0 %788
        %v790 = vsel %vm732, %v772, 0.0
        %791 = vadd.xlane.f32.xlu0 %v790
        %v792 = vpop.xlane.xlu0 %791
        %v793 = vsel %vm732, %v774, 0.0
        %794 = vadd.xlane.f32.xlu0 %v793
        %v795 = vpop.xlane.xlu0 %794
        %v796 = vsel %vm732, %v776, 0.0
        %797 = vadd.xlane.f32.xlu0 %v796
        %v798 = vpop.xlane.xlu0 %797
        %v799 = vsel %vm732, %v778, 0.0
        %800 = vadd.xlane.f32.xlu0 %v799
        %v801 = vpop.xlane.xlu0 %800
        %v802 = vsel %vm732, %v780, 0.0
        %803 = vadd.xlane.f32.xlu0 %v802
        %v804 = vpop.xlane.xlu0 %803
        %v805 = vrcp.pop %v783
        %v806 = vmul.f32 %v783, %v805
        %v807 = vsub.f32 1.0, %v806
        %v808 = vmul.f32 %v805, %v807
        %v809 = vadd.f32 %v805, %v808
        %vm810 = vweird.f32 %v783
        %vm811 = vweird.f32 %v805
        %vm812 = vmor %vm810, %vm811
        %v813 = vsel %vm812, %v805, %v809
        %v814 = vand.u32 2147483647, %v783
        %vm815 = vcmp.eq.f32.partialorder %v814, 8.507059e+37
        %v816 = vand.u32 %v783, 2147483648
        %v817 = vor.u32 1.1754944e-38, %v816
        %v818 = vsel %vm815, %v817, %v813
        %v819 = vmul.f32 %v766, %v818
        %v820 = vrcp.pop %v786
        %v821 = vmul.f32 %v786, %v820
        %v822 = vsub.f32 1.0, %v821
        %v823 = vmul.f32 %v820, %v822
        %v824 = vadd.f32 %v820, %v823
        %vm825 = vweird.f32 %v786
        %vm826 = vweird.f32 %v820
        %vm827 = vmor %vm825, %vm826
        %v828 = vsel %vm827, %v820, %v824
        %v829 = vand.u32 2147483647, %v786
        %vm830 = vcmp.eq.f32.partialorder %v829, 8.507059e+37
        %v831 = vand.u32 %v786, 2147483648
        %v832 = vor.u32 1.1754944e-38, %v831
        %v833 = vsel %vm830, %v832, %v828
        %v834 = vmul.f32 %v768, %v833
        %v835 = vrcp.pop %v789
        %v836 = vmul.f32 %v789, %v835
        %v837 = vsub.f32 1.0, %v836
        %v838 = vmul.f32 %v835, %v837
        %v839 = vadd.f32 %v835, %v838
        %vm840 = vweird.f32 %v789
        %vm841 = vweird.f32 %v835
        %vm842 = vmor %vm840, %vm841
        %v843 = vsel %vm842, %v835, %v839
        %v844 = vand.u32 2147483647, %v789
        %vm845 = vcmp.eq.f32.partialorder %v844, 8.507059e+37
        %v846 = vand.u32 %v789, 2147483648
        %v847 = vor.u32 1.1754944e-38, %v846
        %v848 = vsel %vm845, %v847, %v843
        %v849 = vmul.f32 %v770, %v848
        %v850 = vrcp.pop %v792
        %v851 = vmul.f32 %v792, %v850
        %v852 = vsub.f32 1.0, %v851
        %v853 = vmul.f32 %v850, %v852
        %v854 = vadd.f32 %v850, %v853
        %vm855 = vweird.f32 %v792
        %vm856 = vweird.f32 %v850
        %vm857 = vmor %vm855, %vm856
        %v858 = vsel %vm857, %v850, %v854
        %v859 = vand.u32 2147483647, %v792
        %vm860 = vcmp.eq.f32.partialorder %v859, 8.507059e+37
        %v861 = vand.u32 %v792, 2147483648
        %v862 = vor.u32 1.1754944e-38, %v861
        %v863 = vsel %vm860, %v862, %v858
        %v864 = vmul.f32 %v772, %v863
        %v865 = vrcp.pop %v795
        %v866 = vmul.f32 %v795, %v865
        %v867 = vsub.f32 1.0, %v866
        %v868 = vmul.f32 %v865, %v867
        %v869 = vadd.f32 %v865, %v868
        %vm870 = vweird.f32 %v795
        %vm871 = vweird.f32 %v865
        %vm872 = vmor %vm870, %vm871
        %v873 = vsel %vm872, %v865, %v869
        %v874 = vand.u32 2147483647, %v795
        %vm875 = vcmp.eq.f32.partialorder %v874, 8.507059e+37
        %v876 = vand.u32 %v795, 2147483648
        %v877 = vor.u32 1.1754944e-38, %v876
        %v878 = vsel %vm875, %v877, %v873
        %v879 = vmul.f32 %v774, %v878
        %v880 = vrcp.pop %v798
        %v881 = vmul.f32 %v798, %v880
        %v882 = vsub.f32 1.0, %v881
        %v883 = vmul.f32 %v880, %v882
        %v884 = vadd.f32 %v880, %v883
        %vm885 = vweird.f32 %v798
        %vm886 = vweird.f32 %v880
        %vm887 = vmor %vm885, %vm886
        %v888 = vsel %vm887, %v880, %v884
        %v889 = vand.u32 2147483647, %v798
        %vm890 = vcmp.eq.f32.partialorder %v889, 8.507059e+37
        %v891 = vand.u32 %v798, 2147483648
        %v892 = vor.u32 1.1754944e-38, %v891
        %v893 = vsel %vm890, %v892, %v888
        %v894 = vmul.f32 %v776, %v893
        %v895 = vrcp.pop %v801
        %v896 = vmul.f32 %v801, %v895
        %v897 = vsub.f32 1.0, %v896
        %v898 = vmul.f32 %v895, %v897
        %v899 = vadd.f32 %v895, %v898
        %vm900 = vweird.f32 %v801
        %vm901 = vweird.f32 %v895
        %vm902 = vmor %vm900, %vm901
        %v903 = vsel %vm902, %v895, %v899
        %v904 = vand.u32 2147483647, %v801
        %vm905 = vcmp.eq.f32.partialorder %v904, 8.507059e+37
        %v906 = vand.u32 %v801, 2147483648
        %v907 = vor.u32 1.1754944e-38, %v906
        %v908 = vsel %vm905, %v907, %v903
        %v909 = vmul.f32 %v778, %v908
        %v910 = vrcp.pop %v804
        %v911 = vmul.f32 %v804, %v910
        %v912 = vsub.f32 1.0, %v911
        %v913 = vmul.f32 %v910, %v912
        %v914 = vadd.f32 %v910, %v913
        %vm915 = vweird.f32 %v804
        %vm916 = vweird.f32 %v910
        %vm917 = vmor %vm915, %vm916
        %v918 = vsel %vm917, %v910, %v914
        %v919 = vand.u32 2147483647, %v804
        %vm920 = vcmp.eq.f32.partialorder %v919, 8.507059e+37
        %v921 = vand.u32 %v804, 2147483648
        %v922 = vor.u32 1.1754944e-38, %v921
        %v923 = vsel %vm920, %v922, %v918
        %v924 = vmul.f32 %v780, %v923
        %v925 = vsel %vm732, %v819, 0.0
        %v926 = vsel %vm732, %v849, 0.0
        %v927 = vadd.f32 %v925, %v926
        %v928 = vsel %vm732, %v879, 0.0
        %v929 = vadd.f32 %v927, %v928
        %v930 = vsel %vm732, %v909, 0.0
        %v931 = vadd.f32 %v929, %v930
        %v932 = vsel %vm732, %v834, 0.0
        %v933 = vsel %vm732, %v864, 0.0
        %v934 = vadd.f32 %v932, %v933
        %v935 = vsel %vm732, %v894, 0.0
        %v936 = vadd.f32 %v934, %v935
        %v937 = vsel %vm732, %v924, 0.0
        %v938 = vadd.f32 %v936, %v937
        %939 = vxpose.xlu0.b32.start [1/16] %v931, 128
        %940 = vxpose.xlu0.b32.cont [2/16] %v938, 128
        %941 = vxpose.xlu0.b32.cont [3/16] 0.0, 128
        %942 = vxpose.xlu0.b32.cont [4/16] 0.0, 128
        %943 = vxpose.xlu0.b32.cont [5/16] 0.0, 128
        %944 = vxpose.xlu0.b32.cont [6/16] 0.0, 128
        %945 = vxpose.xlu0.b32.cont [7/16] 0.0, 128
        %946 = vxpose.xlu0.b32.cont [8/16] 0.0, 128
        %947 = vxpose.xlu0.b32.cont [9/16] 0.0, 128
        %948 = vxpose.xlu0.b32.cont [10/16] 0.0, 128
        %949 = vxpose.xlu0.b32.cont [11/16] 0.0, 128
        %950 = vxpose.xlu0.b32.cont [12/16] 0.0, 128
        %951 = vxpose.xlu0.b32.cont [13/16] 0.0, 128
        %952 = vxpose.xlu0.b32.cont [14/16] 0.0, 128
        %953 = vxpose.xlu0.b32.cont [15/16] 0.0, 128
        %954 = vxpose.xlu0.b32.end [16/16] 0.0, 128
        %v955 = vpop.trf.xlu0
        %v956 = vpop.trf.xlu0
        %v957 = vpop.trf.xlu0
        %v958 = vpop.trf.xlu0
        %v959 = vpop.trf.xlu0
        %v960 = vpop.trf.xlu0
        %v961 = vpop.trf.xlu0
        %v962 = vpop.trf.xlu0
        %v963 = vpop.trf.xlu0
        %v964 = vpop.trf.xlu0
        %v965 = vpop.trf.xlu0
        %v966 = vpop.trf.xlu0
        %v967 = vpop.trf.xlu0
        %v968 = vpop.trf.xlu0
        %v969 = vpop.trf.xlu0
        %v970 = vpop.trf.xlu0
        %v972 = vsel %vm732, %v955, 0
        %v975 = vsel %vm732, %v956, 0
        %977 = vmatpush.msra.mxu0 0.0
        %978 = vmatpush.msra.mxu0 0.0
        %979 = vmatpush.msra.mxu0 0.0
        %980 = vmatpush.msra.mxu0 0.0
        %981 = vmatpush.msra.mxu0 0.0
        %982 = vmatpush.msra.mxu0 0.0
        %983 = vmatpush.msra.mxu0 0.0
        %984 = vmatpush.msra.mxu0 0.0
        %985 = vmatpush.msra.mxu0 0.0
        %986 = vmatpush.msra.mxu0 0.0
        %987 = vmatpush.msra.mxu0 0.0
        %988 = vmatpush.msra.mxu0 0.0
        %989 = vmatpush.msra.mxu0 0.0
        %990 = vmatpush.msra.mxu0 0.0
        %991 = vmatpush.msra.mxu0 %v581
        %992 = vmatpush.msra.mxu0 %v578
        %993 = vmatmul.f32.gmra.mxu0 %v972
        %v994 = vpop.f32.mrf.mxu0
        %v995 = vadd.f32 0.0, %v994
        %996 = vmatmul.f32.gmra.mxu0 %v975
        %v997 = vpop.f32.mrf.mxu0
        %v998 = vadd.f32 0.0, %v997
        %999 = vdwg.mxu0
        %v1001 = vsel %vm591, %v995, 0
        %v1004 = vsel %vm591, %v998, 0
        %1006 = vmatpush.msra.mxu0 0.0
        %1007 = vmatpush.msra.mxu0 0.0
        %1008 = vmatpush.msra.mxu0 0.0
        %1009 = vmatpush.msra.mxu0 0.0
        %1010 = vmatpush.msra.mxu0 0.0
        %1011 = vmatpush.msra.mxu0 0.0
        %1012 = vmatpush.msra.mxu0 0.0
        %1013 = vmatpush.msra.mxu0 0.0
        %1014 = vmatpush.msra.mxu0 %v542
        %1015 = vmatpush.msra.mxu0 %v541
        %1016 = vmatpush.msra.mxu0 %v540
        %1017 = vmatpush.msra.mxu0 %v539
        %1018 = vmatpush.msra.mxu0 %v538
        %1019 = vmatpush.msra.mxu0 %v537
        %1020 = vmatpush.msra.mxu0 %v536
        %1021 = vmatpush.msra.mxu0 %v535
        %1022 = vmatmul.f32.gmra.mxu0 %v1001
        %v1023 = vpop.f32.mrf.mxu0
        %v1024 = vadd.f32 0.0, %v1023
        %1025 = vmatmul.f32.gmra.mxu0 %v1004
        %v1026 = vpop.f32.mrf.mxu0
        %v1027 = vadd.f32 0.0, %v1026
        %1028 = vdwg.mxu0
        %vm1029 = vcmp.gt.f32.partialorder %v1024, 0.0
        %vm1030 = vcmp.gt.f32.partialorder %v1027, 0.0
        %v1031 = vmul.f32 %v1024, 0.01
        %v1032 = vmul.f32 %v1027, 0.01
        %v1033 = vsel %vm1029, %v1024, %v1031
        %v1034 = vsel %vm1030, %v1027, %v1032
        %v1036 = vsel %vm732, %v1033, 0
        %v1039 = vsel %vm732, %v1034, 0
        %1041 = vmatpush.msra.mxu0 0.0
        %1042 = vmatpush.msra.mxu0 0.0
        %1043 = vmatpush.msra.mxu0 0.0
        %1044 = vmatpush.msra.mxu0 0.0
        %1045 = vmatpush.msra.mxu0 0.0
        %1046 = vmatpush.msra.mxu0 0.0
        %1047 = vmatpush.msra.mxu0 0.0
        %1048 = vmatpush.msra.mxu0 0.0
        %1049 = vmatpush.msra.mxu0 0.0
        %1050 = vmatpush.msra.mxu0 0.0
        %1051 = vmatpush.msra.mxu0 0.0
        %1052 = vmatpush.msra.mxu0 0.0
        %1053 = vmatpush.msra.mxu0 0.0
        %1054 = vmatpush.msra.mxu0 0.0
        %1055 = vmatpush.msra.mxu0 %v544
        %1056 = vmatpush.msra.mxu0 %v543
        %1057 = vmatmul.f32.gmra.mxu0 %v1036
        %v1058 = vpop.f32.mrf.mxu0
        %v1059 = vadd.f32 0.0, %v1058
        %1060 = vmatmul.f32.gmra.mxu0 %v1039
        %v1061 = vpop.f32.mrf.mxu0
        %v1062 = vadd.f32 0.0, %v1061
        %1063 = vdwg.mxu0
        %v1064 = vld [vmem:[%s455] sm:$0xff]
        %v1065 = vld [vmem:[%s455 + $0x8] sm:$0xff]
        %v1066 = vld [vmem:[%s455 + $0x10] sm:$0xff]
        %v1067 = vld [vmem:[%s455 + $0x18] sm:$0xff]
        %v1068 = vld [vmem:[%s455 + $0x20] sm:$0xff]
        %v1069 = vld [vmem:[%s455 + $0x28] sm:$0xff]
        %v1070 = vld [vmem:[%s455 + $0x30] sm:$0xff]
        %v1071 = vld [vmem:[%s455 + $0x38] sm:$0xff]
        %v1073 = vsel %vm553, %v545, 0
        %v1076 = vsel %vm553, %v1059, 0
        %v1079 = vsel %vm553, %v1062, 0
        %1081 = vmatpush.xpose.msra.mxu0 0.0
        %1082 = vmatpush.xpose.msra.mxu0 0.0
        %1083 = vmatpush.xpose.msra.mxu0 0.0
        %1084 = vmatpush.xpose.msra.mxu0 0.0
        %1085 = vmatpush.xpose.msra.mxu0 0.0
        %1086 = vmatpush.xpose.msra.mxu0 0.0
        %1087 = vmatpush.xpose.msra.mxu0 0.0
        %1088 = vmatpush.xpose.msra.mxu0 0.0
        %1089 = vmatpush.xpose.msra.mxu0 0.0
        %1090 = vmatpush.xpose.msra.mxu0 0.0
        %1091 = vmatpush.xpose.msra.mxu0 0.0
        %1092 = vmatpush.xpose.msra.mxu0 0.0
        %1093 = vmatpush.xpose.msra.mxu0 0.0
        %1094 = vmatpush.xpose.msra.mxu0 0.0
        %1095 = vmatpush.xpose.msra.mxu0 %v1079
        %1096 = vmatpush.xpose.msra.mxu0 %v1076
        %1097 = vmatmul.f32.gmra.mxu0 %v1073
        %v1098 = vpop.f32.mrf.mxu0
        %v1099 = vadd.f32 0.0, %v1098
        %1100 = vdwg.mxu0
        %v1102 = vsel %vm553, %v546, 0
        %1104 = vmatpush.xpose.msra.mxu0 0.0
        %1105 = vmatpush.xpose.msra.mxu0 0.0
        %1106 = vmatpush.xpose.msra.mxu0 0.0
        %1107 = vmatpush.xpose.msra.mxu0 0.0
        %1108 = vmatpush.xpose.msra.mxu0 0.0
        %1109 = vmatpush.xpose.msra.mxu0 0.0
        %1110 = vmatpush.xpose.msra.mxu0 0.0
        %1111 = vmatpush.xpose.msra.mxu0 0.0
        %1112 = vmatpush.xpose.msra.mxu0 0.0
        %1113 = vmatpush.xpose.msra.mxu0 0.0
        %1114 = vmatpush.xpose.msra.mxu0 0.0
        %1115 = vmatpush.xpose.msra.mxu0 0.0
        %1116 = vmatpush.xpose.msra.mxu0 0.0
        %1117 = vmatpush.xpose.msra.mxu0 0.0
        %1118 = vmatpush.xpose.msra.mxu0 %v1079
        %1119 = vmatpush.xpose.msra.mxu0 %v1076
        %1120 = vmatmul.f32.gmra.mxu0 %v1102
        %v1121 = vpop.f32.mrf.mxu0
        %v1122 = vadd.f32 0.0, %v1121
        %1123 = vdwg.mxu0
        %v1124 = vperm.slane %v1099, 0
        %v1125 = vlaneseq
        %v1126 = vshrl.u32 %v1125, 7
        %1128 = vset.pattern.permute.xlu0 %v1126
        %1129 = vperm.xlu0 %1128, %v1124
        %v1130 = vpop.permute.xlu0 %1129
        %v1131 = vlaneseq
        %v1132 = vshrl.u32 %v1131, 7
        %v1133 = vadd.s32 %v1132, 8
        %1134 = vset.pattern.permute.xlu0 %v1133
        %1135 = vperm.xlu0 %1134, %v1124
        %v1136 = vpop.permute.xlu0 %1135
        %v1137 = vperm.slane %v1099, 1
        %v1138 = vlaneseq
        %v1139 = vshrl.u32 %v1138, 7
        %1141 = vset.pattern.permute.xlu0 %v1139
        %1142 = vperm.xlu0 %1141, %v1137
        %v1143 = vpop.permute.xlu0 %1142
        %v1144 = vlaneseq
        %v1145 = vshrl.u32 %v1144, 7
        %v1146 = vadd.s32 %v1145, 8
        %1147 = vset.pattern.permute.xlu0 %v1146
        %1148 = vperm.xlu0 %1147, %v1137
        %v1149 = vpop.permute.xlu0 %1148
        %v1150 = vperm.slane %v1099, 2
        %v1151 = vlaneseq
        %v1152 = vshrl.u32 %v1151, 7
        %1154 = vset.pattern.permute.xlu0 %v1152
        %1155 = vperm.xlu0 %1154, %v1150
        %v1156 = vpop.permute.xlu0 %1155
        %v1157 = vlaneseq
        %v1158 = vshrl.u32 %v1157, 7
        %v1159 = vadd.s32 %v1158, 8
        %1160 = vset.pattern.permute.xlu0 %v1159
        %1161 = vperm.xlu0 %1160, %v1150
        %v1162 = vpop.permute.xlu0 %1161
        %v1163 = vperm.slane %v1099, 3
        %v1164 = vlaneseq
        %v1165 = vshrl.u32 %v1164, 7
        %1167 = vset.pattern.permute.xlu0 %v1165
        %1168 = vperm.xlu0 %1167, %v1163
        %v1169 = vpop.permute.xlu0 %1168
        %v1170 = vlaneseq
        %v1171 = vshrl.u32 %v1170, 7
        %v1172 = vadd.s32 %v1171, 8
        %1173 = vset.pattern.permute.xlu0 %v1172
        %1174 = vperm.xlu0 %1173, %v1163
        %v1175 = vpop.permute.xlu0 %1174
        %v1177 = vrot.slane %v1122, 1
        %v1178 = vrot.slane %v1122, 2
        %v1179 = vrot.slane %v1122, 3
        %v1180 = vperm.slane %v1122, 0
        %v1181 = vperm.slane %v1177, 0
        %v1182 = vperm.slane %v1178, 0
        %v1183 = vperm.slane %v1179, 0
        %v1188 = vadd.f32 %v1130, %v1180
        %v1189 = vadd.f32 %v1136, %v1180
        %v1190 = vadd.f32 %v1143, %v1181
        %v1191 = vadd.f32 %v1149, %v1181
        %v1192 = vadd.f32 %v1156, %v1182
        %v1193 = vadd.f32 %v1162, %v1182
        %v1194 = vadd.f32 %v1169, %v1183
        %v1195 = vadd.f32 %v1175, %v1183
        %v1196 = vmul.f32 %v1188, %v527
        %v1197 = vmul.f32 %v1189, %v528
        %v1198 = vmul.f32 %v1190, %v527
        %v1199 = vmul.f32 %v1191, %v528
        %v1200 = vmul.f32 %v1192, %v527
        %v1201 = vmul.f32 %v1193, %v528
        %v1202 = vmul.f32 %v1194, %v527
        %v1203 = vmul.f32 %v1195, %v528
        %v1204 = vadd.f32 %v1196, %v1064
        %v1205 = vadd.f32 %v1197, %v1065
        %v1206 = vadd.f32 %v1198, %v1066
        %v1207 = vadd.f32 %v1199, %v1067
        %v1208 = vadd.f32 %v1200, %v1068
        %v1209 = vadd.f32 %v1201, %v1069
        %v1210 = vadd.f32 %v1202, %v1070
        %v1211 = vadd.f32 %v1203, %v1071
        %v1212 = vsel %vm732, %v1204, -inf
        %1213 = vmax.xlane.f32.xlu0 %v1212
        %v1214 = vpop.xlane.xlu0 %1213
        %v1215 = vsel %vm732, %v1205, -inf
        %1216 = vmax.xlane.f32.xlu0 %v1215
        %v1217 = vpop.xlane.xlu0 %1216
        %v1218 = vsel %vm732, %v1206, -inf
        %1219 = vmax.xlane.f32.xlu0 %v1218
        %v1220 = vpop.xlane.xlu0 %1219
        %v1221 = vsel %vm732, %v1207, -inf
        %1222 = vmax.xlane.f32.xlu0 %v1221
        %v1223 = vpop.xlane.xlu0 %1222
        %v1224 = vsel %vm732, %v1208, -inf
        %1225 = vmax.xlane.f32.xlu0 %v1224
        %v1226 = vpop.xlane.xlu0 %1225
        %v1227 = vsel %vm732, %v1209, -inf
        %1228 = vmax.xlane.f32.xlu0 %v1227
        %v1229 = vpop.xlane.xlu0 %1228
        %v1230 = vsel %vm732, %v1210, -inf
        %1231 = vmax.xlane.f32.xlu0 %v1230
        %v1232 = vpop.xlane.xlu0 %1231
        %v1233 = vsel %vm732, %v1211, -inf
        %1234 = vmax.xlane.f32.xlu0 %v1233
        %v1235 = vpop.xlane.xlu0 %1234
        %v1236 = vsub.f32 %v1204, %v1214
        %v1237 = vsub.f32 %v1205, %v1217
        %v1238 = vsub.f32 %v1206, %v1220
        %v1239 = vsub.f32 %v1207, %v1223
        %v1240 = vsub.f32 %v1208, %v1226
        %v1241 = vsub.f32 %v1209, %v1229
        %v1242 = vsub.f32 %v1210, %v1232
        %v1243 = vsub.f32 %v1211, %v1235
        %v1244 = vmul.f32 %v1236, 1.442695
        %v1245 = vpow.pop %v1244
        %v1246 = vmul.f32 %v1237, 1.442695
        %v1247 = vpow.pop %v1246
        %v1248 = vmul.f32 %v1238, 1.442695
        %v1249 = vpow.pop %v1248
        %v1250 = vmul.f32 %v1239, 1.442695
        %v1251 = vpow.pop %v1250
        %v1252 = vmul.f32 %v1240, 1.442695
        %v1253 = vpow.pop %v1252
        %v1254 = vmul.f32 %v1241, 1.442695
        %v1255 = vpow.pop %v1254
        %v1256 = vmul.f32 %v1242, 1.442695
        %v1257 = vpow.pop %v1256
        %v1258 = vmul.f32 %v1243, 1.442695
        %v1259 = vpow.pop %v1258
        %v1260 = vsel %vm732, %v1245, 0.0
        %1261 = vadd.xlane.f32.xlu0 %v1260
        %v1262 = vpop.xlane.xlu0 %1261
        %v1263 = vsel %vm732, %v1247, 0.0
        %1264 = vadd.xlane.f32.xlu0 %v1263
        %v1265 = vpop.xlane.xlu0 %1264
        %v1266 = vsel %vm732, %v1249, 0.0
        %1267 = vadd.xlane.f32.xlu0 %v1266
        %v1268 = vpop.xlane.xlu0 %1267
        %v1269 = vsel %vm732, %v1251, 0.0
        %1270 = vadd.xlane.f32.xlu0 %v1269
        %v1271 = vpop.xlane.xlu0 %1270
        %v1272 = vsel %vm732, %v1253, 0.0
        %1273 = vadd.xlane.f32.xlu0 %v1272
        %v1274 = vpop.xlane.xlu0 %1273
        %v1275 = vsel %vm732, %v1255, 0.0
        %1276 = vadd.xlane.f32.xlu0 %v1275
        %v1277 = vpop.xlane.xlu0 %1276
        %v1278 = vsel %vm732, %v1257, 0.0
        %1279 = vadd.xlane.f32.xlu0 %v1278
        %v1280 = vpop.xlane.xlu0 %1279
        %v1281 = vsel %vm732, %v1259, 0.0
        %1282 = vadd.xlane.f32.xlu0 %v1281
        %v1283 = vpop.xlane.xlu0 %1282
        %v1284 = vrcp.pop %v1262
        %v1285 = vmul.f32 %v1262, %v1284
        %v1286 = vsub.f32 1.0, %v1285
        %v1287 = vmul.f32 %v1284, %v1286
        %v1288 = vadd.f32 %v1284, %v1287
        %vm1289 = vweird.f32 %v1262
        %vm1290 = vweird.f32 %v1284
        %vm1291 = vmor %vm1289, %vm1290
        %v1292 = vsel %vm1291, %v1284, %v1288
        %v1293 = vand.u32 2147483647, %v1262
        %vm1294 = vcmp.eq.f32.partialorder %v1293, 8.507059e+37
        %v1295 = vand.u32 %v1262, 2147483648
        %v1296 = vor.u32 1.1754944e-38, %v1295
        %v1297 = vsel %vm1294, %v1296, %v1292
        %v1298 = vmul.f32 %v1245, %v1297
        %v1299 = vrcp.pop %v1265
        %v1300 = vmul.f32 %v1265, %v1299
        %v1301 = vsub.f32 1.0, %v1300
        %v1302 = vmul.f32 %v1299, %v1301
        %v1303 = vadd.f32 %v1299, %v1302
        %vm1304 = vweird.f32 %v1265
        %vm1305 = vweird.f32 %v1299
        %vm1306 = vmor %vm1304, %vm1305
        %v1307 = vsel %vm1306, %v1299, %v1303
        %v1308 = vand.u32 2147483647, %v1265
        %vm1309 = vcmp.eq.f32.partialorder %v1308, 8.507059e+37
        %v1310 = vand.u32 %v1265, 2147483648
        %v1311 = vor.u32 1.1754944e-38, %v1310
        %v1312 = vsel %vm1309, %v1311, %v1307
        %v1313 = vmul.f32 %v1247, %v1312
        %v1314 = vrcp.pop %v1268
        %v1315 = vmul.f32 %v1268, %v1314
        %v1316 = vsub.f32 1.0, %v1315
        %v1317 = vmul.f32 %v1314, %v1316
        %v1318 = vadd.f32 %v1314, %v1317
        %vm1319 = vweird.f32 %v1268
        %vm1320 = vweird.f32 %v1314
        %vm1321 = vmor %vm1319, %vm1320
        %v1322 = vsel %vm1321, %v1314, %v1318
        %v1323 = vand.u32 2147483647, %v1268
        %vm1324 = vcmp.eq.f32.partialorder %v1323, 8.507059e+37
        %v1325 = vand.u32 %v1268, 2147483648
        %v1326 = vor.u32 1.1754944e-38, %v1325
        %v1327 = vsel %vm1324, %v1326, %v1322
        %v1328 = vmul.f32 %v1249, %v1327
        %v1329 = vrcp.pop %v1271
        %v1330 = vmul.f32 %v1271, %v1329
        %v1331 = vsub.f32 1.0, %v1330
        %v1332 = vmul.f32 %v1329, %v1331
        %v1333 = vadd.f32 %v1329, %v1332
        %vm1334 = vweird.f32 %v1271
        %vm1335 = vweird.f32 %v1329
        %vm1336 = vmor %vm1334, %vm1335
        %v1337 = vsel %vm1336, %v1329, %v1333
        %v1338 = vand.u32 2147483647, %v1271
        %vm1339 = vcmp.eq.f32.partialorder %v1338, 8.507059e+37
        %v1340 = vand.u32 %v1271, 2147483648
        %v1341 = vor.u32 1.1754944e-38, %v1340
        %v1342 = vsel %vm1339, %v1341, %v1337
        %v1343 = vmul.f32 %v1251, %v1342
        %v1344 = vrcp.pop %v1274
        %v1345 = vmul.f32 %v1274, %v1344
        %v1346 = vsub.f32 1.0, %v1345
        %v1347 = vmul.f32 %v1344, %v1346
        %v1348 = vadd.f32 %v1344, %v1347
        %vm1349 = vweird.f32 %v1274
        %vm1350 = vweird.f32 %v1344
        %vm1351 = vmor %vm1349, %vm1350
        %v1352 = vsel %vm1351, %v1344, %v1348
        %v1353 = vand.u32 2147483647, %v1274
        %vm1354 = vcmp.eq.f32.partialorder %v1353, 8.507059e+37
        %v1355 = vand.u32 %v1274, 2147483648
        %v1356 = vor.u32 1.1754944e-38, %v1355
        %v1357 = vsel %vm1354, %v1356, %v1352
        %v1358 = vmul.f32 %v1253, %v1357
        %v1359 = vrcp.pop %v1277
        %v1360 = vmul.f32 %v1277, %v1359
        %v1361 = vsub.f32 1.0, %v1360
        %v1362 = vmul.f32 %v1359, %v1361
        %v1363 = vadd.f32 %v1359, %v1362
        %vm1364 = vweird.f32 %v1277
        %vm1365 = vweird.f32 %v1359
        %vm1366 = vmor %vm1364, %vm1365
        %v1367 = vsel %vm1366, %v1359, %v1363
        %v1368 = vand.u32 2147483647, %v1277
        %vm1369 = vcmp.eq.f32.partialorder %v1368, 8.507059e+37
        %v1370 = vand.u32 %v1277, 2147483648
        %v1371 = vor.u32 1.1754944e-38, %v1370
        %v1372 = vsel %vm1369, %v1371, %v1367
        %v1373 = vmul.f32 %v1255, %v1372
        %v1374 = vrcp.pop %v1280
        %v1375 = vmul.f32 %v1280, %v1374
        %v1376 = vsub.f32 1.0, %v1375
        %v1377 = vmul.f32 %v1374, %v1376
        %v1378 = vadd.f32 %v1374, %v1377
        %vm1379 = vweird.f32 %v1280
        %vm1380 = vweird.f32 %v1374
        %vm1381 = vmor %vm1379, %vm1380
        %v1382 = vsel %vm1381, %v1374, %v1378
        %v1383 = vand.u32 2147483647, %v1280
        %vm1384 = vcmp.eq.f32.partialorder %v1383, 8.507059e+37
        %v1385 = vand.u32 %v1280, 2147483648
        %v1386 = vor.u32 1.1754944e-38, %v1385
        %v1387 = vsel %vm1384, %v1386, %v1382
        %v1388 = vmul.f32 %v1257, %v1387
        %v1389 = vrcp.pop %v1283
        %v1390 = vmul.f32 %v1283, %v1389
        %v1391 = vsub.f32 1.0, %v1390
        %v1392 = vmul.f32 %v1389, %v1391
        %v1393 = vadd.f32 %v1389, %v1392
        %vm1394 = vweird.f32 %v1283
        %vm1395 = vweird.f32 %v1389
        %vm1396 = vmor %vm1394, %vm1395
        %v1397 = vsel %vm1396, %v1389, %v1393
        %v1398 = vand.u32 2147483647, %v1283
        %vm1399 = vcmp.eq.f32.partialorder %v1398, 8.507059e+37
        %v1400 = vand.u32 %v1283, 2147483648
        %v1401 = vor.u32 1.1754944e-38, %v1400
        %v1402 = vsel %vm1399, %v1401, %v1397
        %v1403 = vmul.f32 %v1259, %v1402
        %v1404 = vsel %vm732, %v1298, 0.0
        %v1405 = vsel %vm732, %v1328, 0.0
        %v1406 = vadd.f32 %v1404, %v1405
        %v1407 = vsel %vm732, %v1358, 0.0
        %v1408 = vadd.f32 %v1406, %v1407
        %v1409 = vsel %vm732, %v1388, 0.0
        %v1410 = vadd.f32 %v1408, %v1409
        %v1411 = vsel %vm732, %v1313, 0.0
        %v1412 = vsel %vm732, %v1343, 0.0
        %v1413 = vadd.f32 %v1411, %v1412
        %v1414 = vsel %vm732, %v1373, 0.0
        %v1415 = vadd.f32 %v1413, %v1414
        %v1416 = vsel %vm732, %v1403, 0.0
        %v1417 = vadd.f32 %v1415, %v1416
        %1418 = vxpose.xlu0.b32.start [1/16] %v1410, 128
        %1419 = vxpose.xlu0.b32.cont [2/16] %v1417, 128
        %1420 = vxpose.xlu0.b32.cont [3/16] 0.0, 128
        %1421 = vxpose.xlu0.b32.cont [4/16] 0.0, 128
        %1422 = vxpose.xlu0.b32.cont [5/16] 0.0, 128
        %1423 = vxpose.xlu0.b32.cont [6/16] 0.0, 128
        %1424 = vxpose.xlu0.b32.cont [7/16] 0.0, 128
        %1425 = vxpose.xlu0.b32.cont [8/16] 0.0, 128
        %1426 = vxpose.xlu0.b32.cont [9/16] 0.0, 128
        %1427 = vxpose.xlu0.b32.cont [10/16] 0.0, 128
        %1428 = vxpose.xlu0.b32.cont [11/16] 0.0, 128
        %1429 = vxpose.xlu0.b32.cont [12/16] 0.0, 128
        %1430 = vxpose.xlu0.b32.cont [13/16] 0.0, 128
        %1431 = vxpose.xlu0.b32.cont [14/16] 0.0, 128
        %1432 = vxpose.xlu0.b32.cont [15/16] 0.0, 128
        %1433 = vxpose.xlu0.b32.end [16/16] 0.0, 128
        %v1434 = vpop.trf.xlu0
        %v1435 = vpop.trf.xlu0
        %v1436 = vpop.trf.xlu0
        %v1437 = vpop.trf.xlu0
        %v1438 = vpop.trf.xlu0
        %v1439 = vpop.trf.xlu0
        %v1440 = vpop.trf.xlu0
        %v1441 = vpop.trf.xlu0
        %v1442 = vpop.trf.xlu0
        %v1443 = vpop.trf.xlu0
        %v1444 = vpop.trf.xlu0
        %v1445 = vpop.trf.xlu0
        %v1446 = vpop.trf.xlu0
        %v1447 = vpop.trf.xlu0
        %v1448 = vpop.trf.xlu0
        %v1449 = vpop.trf.xlu0
        %v1451 = vsel %vm732, %v1434, 0
        %v1454 = vsel %vm732, %v1435, 0
        %1456 = vmatpush.msra.mxu0 0.0
        %1457 = vmatpush.msra.mxu0 0.0
        %1458 = vmatpush.msra.mxu0 0.0
        %1459 = vmatpush.msra.mxu0 0.0
        %1460 = vmatpush.msra.mxu0 0.0
        %1461 = vmatpush.msra.mxu0 0.0
        %1462 = vmatpush.msra.mxu0 0.0
        %1463 = vmatpush.msra.mxu0 0.0
        %1464 = vmatpush.msra.mxu0 0.0
        %1465 = vmatpush.msra.mxu0 0.0
        %1466 = vmatpush.msra.mxu0 0.0
        %1467 = vmatpush.msra.mxu0 0.0
        %1468 = vmatpush.msra.mxu0 0.0
        %1469 = vmatpush.msra.mxu0 0.0
        %1470 = vmatpush.msra.mxu0 %v1062
        %1471 = vmatpush.msra.mxu0 %v1059
        %1472 = vmatmul.f32.gmra.mxu0 %v1451
        %v1473 = vpop.f32.mrf.mxu0
        %v1474 = vadd.f32 0.0, %v1473
        %1475 = vmatmul.f32.gmra.mxu0 %v1454
        %v1476 = vpop.f32.mrf.mxu0
        %v1477 = vadd.f32 0.0, %v1476
        %1478 = vdwg.mxu0
        %v1480 = vsel %vm553, %v1474, 0
        %v1483 = vsel %vm553, %v1477, 0
        %1485 = vmatpush.msra.mxu0 0.0
        %1486 = vmatpush.msra.mxu0 0.0
        %1487 = vmatpush.msra.mxu0 0.0
        %1488 = vmatpush.msra.mxu0 0.0
        %1489 = vmatpush.msra.mxu0 0.0
        %1490 = vmatpush.msra.mxu0 0.0
        %1491 = vmatpush.msra.mxu0 0.0
        %1492 = vmatpush.msra.mxu0 0.0
        %1493 = vmatpush.msra.mxu0 0.0
        %1494 = vmatpush.msra.mxu0 0.0
        %1495 = vmatpush.msra.mxu0 0.0
        %1496 = vmatpush.msra.mxu0 0.0
        %1497 = vmatpush.msra.mxu0 %v550
        %1498 = vmatpush.msra.mxu0 %v549
        %1499 = vmatpush.msra.mxu0 %v548
        %1500 = vmatpush.msra.mxu0 %v547
        %1501 = vmatmul.f32.gmra.mxu0 %v1480
        %v1502 = vpop.f32.mrf.mxu0
        %v1503 = vadd.f32 0.0, %v1502
        %1504 = vmatmul.f32.gmra.mxu0 %v1483
        %v1505 = vpop.f32.mrf.mxu0
        %v1506 = vadd.f32 0.0, %v1505
        %1507 = vdwg.mxu0
        %vm1508 = vcmp.gt.f32.partialorder %v1503, 0.0
        %vm1509 = vcmp.gt.f32.partialorder %v1506, 0.0
        %v1510 = vmul.f32 %v1503, 0.01
        %v1511 = vmul.f32 %v1506, 0.01
        %v1512 = vsel %vm1508, %v1503, %v1510
        %v1513 = vsel %vm1509, %v1506, %v1511
        %vm1514 = vcmask 64512
        %1515 = vst.msk [vmem:[%s526] sm:$0xff] %vm1514, %v1512
        %1516 = vst.msk [vmem:[%s526 + $0x8] sm:$0xff] %vm1514, %v1513
        %p1517 = scmp.lt.s32.totalorder %s30, 1
        %s1518 = scalar_select %p1517, %s30, 1
        %s1519 = smul.addr %s1518, 2
        %s1520 = smul.addr %s1519, 8
        %s1521 = scalar_lea.vmem %s12, %s1520
        // Predicated region
        $region85: #{tpu_custom_call.1} parent=67 // pred_check
          %p1522 = pneg %p315
        $region86: #{tpu_custom_call.1} parent=67 // pred_check_branch
          %1524 = sbr.rel (%p1522) target = $region88
        $region87: #{tpu_custom_call.1} parent=67 // pred_region
          _
        $region88: #{tpu_custom_call.1} parent=67 // pred_fallthru
          _
      $region68: #{tpu_custom_call.1} parent=5 // pred_fallthru
        _
      %p1525 = scmp.le.s32.totalorder 2, %s25
      // Predicated region
      $region89: #{tpu_custom_call.1} parent=5 // pred_check
        %p1526 = pneg %p1525
      $region90: #{tpu_custom_call.1} parent=5 // pred_check_branch
        %1528 = sbr.rel (%p1526) target = $region92
      $region91: #{tpu_custom_call.1} parent=5 // pred_region
        %s1529 = ssub.s32 %s25, 2
        // Predicated region
        $region93: #{tpu_custom_call.1} parent=91 // pred_check
          %p1530 = pneg %p321
        $region94: #{tpu_custom_call.1} parent=91 // pred_check_branch
          %1532 = sbr.rel (%p1530) target = $region96
        $region95: #{tpu_custom_call.1} parent=91 // pred_region
          %p1533 = scmp.lt.s32.totalorder %s31, 1
          %s1534 = scalar_select %p1533, %s31, 1
          %s1535 = smul.addr %s1534, 2
          %s1536 = smul.addr %s1535, 8
          %s1537 = scalar_lea.vmem %s12, %s1536
        $region96: #{tpu_custom_call.1} parent=91 // pred_fallthru
          _
      $region92: #{tpu_custom_call.1} parent=5 // pred_fallthru
        _
    $region6: #{tpu_custom_call.1} parent=1 // loop_footer
      %s29 = sadd.s32 1, %s25
    $region7: #{tpu_custom_call.1} parent=1 // loop_footer_branch
      %24 = sbr.rel target = $region3
    $region8: #{tpu_custom_call.1} parent=1 // loop_exit
      _
    %1538 = vsyncpa [#allocation3], 1
    %s1539 = scalar_lea.sflag [#allocation3], 1
    %1540 = vsyncpa %s1539, 1
    %1541 = vsyncpa [#allocation5], 1
    %s1542 = scalar_lea.sflag [#allocation5], 1
    %1543 = vsyncpa %s1542, 1
    %1544 = vsyncpa [#allocation8], 1

</llo_original>
